<compile_context>
chip_gen: v6e
topology: v6e:2x2x1
jax: 0.10.0
libtpu: 0.0.40
codegen_flags: <defaults>
</compile_context>

<pallas_src>
import functools

import jax
import jax.numpy as jnp
from jax.experimental import pallas as pl
from jax.experimental.pallas import tpu as pltpu

LN_EPS = 1e-5          # PyTorch nn.LayerNorm default
LANE = 128
MAX_TB = 1024          # batch-tile upper bound (footprint ~15-25 MiB at Din~160)
HIDDEN = (600, 200, 100)


def _round_up(x, m):
    return (x + m - 1) // m * m


def _masked_layernorm(h, gamma, beta, true_d):
    """LayerNorm over the (lane-padded) last axis using only the first
    `true_d` lanes for the statistics.  Padded lanes of `h` are exactly 0 by
    construction and gamma/beta are 0 there, so padded output lanes stay 0."""
    d_pad = h.shape[-1]
    inv_d = 1.0 / true_d
    mu = jnp.sum(h, axis=-1, keepdims=True) * inv_d        # padded lanes are 0
    dev = h - mu
    if d_pad == true_d:
        var = jnp.sum(dev * dev, axis=-1, keepdims=True) * inv_d
    else:
        lane = jax.lax.broadcasted_iota(jnp.int32, (1, d_pad), 1)
        sq = jnp.where(lane < true_d, dev * dev, 0.0)
        var = jnp.sum(sq, axis=-1, keepdims=True) * inv_d
    inv = jax.lax.rsqrt(var + LN_EPS)
    return dev * inv * gamma + beta


def generator_mlp_kernel(
    x_ref,
    w1_ref, b1_ref, g1_ref, be1_ref,
    w2_ref, b2_ref, g2_ref, be2_ref,
    w3_ref, b3_ref, g3_ref, be3_ref,
    w4_ref, b4_ref,
    o_ref,
    *, hidden_dims,
):
    """One batch tile of the Generator MLP, fully fused.

    Matmuls run on the MXU in bf16 with f32 accumulation; LayerNorm / sigmoid
    stay in f32 (rsqrt / sigmoid use the EUP slot); ReLU runs in bf16.
    """
    d1, d2, d3 = hidden_dims
    x = x_ref[...].astype(jnp.bfloat16)      # in-kernel cast (saves an HBM pass)

    h = jnp.dot(x, w1_ref[...], preferred_element_type=jnp.float32) + b1_ref[...]
    h = _masked_layernorm(h, g1_ref[...], be1_ref[...], d1)
    h = jnp.maximum(h.astype(jnp.bfloat16), 0.0)     # bf16 ReLU

    h = jnp.dot(h, w2_ref[...], preferred_element_type=jnp.float32) + b2_ref[...]
    h = _masked_layernorm(h, g2_ref[...], be2_ref[...], d2)
    h = jnp.maximum(h.astype(jnp.bfloat16), 0.0)

    h = jnp.dot(h, w3_ref[...], preferred_element_type=jnp.float32) + b3_ref[...]
    h = _masked_layernorm(h, g3_ref[...], be3_ref[...], d3)
    h = jnp.maximum(h.astype(jnp.bfloat16), 0.0)

    z = jnp.dot(h, w4_ref[...], preferred_element_type=jnp.float32) + b4_ref[...]
    o_ref[...] = jax.nn.sigmoid(z).astype(o_ref.dtype)


def init_generator_params(attack_dim, victim_dim, key):
    """Deterministic PyTorch-like init (uniform +/- 1/sqrt(fan_in)), f32 master copy."""
    in_dim = 1
    for a in attack_dim:
        in_dim *= a
    out_dim = 1
    for v in victim_dim:
        out_dim *= v
    input_shape = in_dim + out_dim

    dims = [input_shape, *HIDDEN, out_dim]
    params = {}
    keys = jax.random.split(key, 8)
    for i in range(4):
        fan_in = dims[i]
        bound = 1.0 / jnp.sqrt(jnp.float32(fan_in))
        params[f"w{i + 1}"] = jax.random.uniform(
            keys[2 * i], (dims[i], dims[i + 1]), jnp.float32, -bound, bound)
        params[f"b{i + 1}"] = jax.random.uniform(
            keys[2 * i + 1], (1, dims[i + 1]), jnp.float32, -bound, bound)
    for i, d in enumerate(HIDDEN, start=1):
        params[f"g{i}"] = jnp.ones((1, d), jnp.float32)
        params[f"be{i}"] = jnp.zeros((1, d), jnp.float32)
    return params, input_shape, out_dim


def prepare_kernel_params(params, out_dim):
    """Lane-dense padding: hidden widths 600/200/100 -> 640/256/128 and the
    output columns -> multiple of 128.  Padded weight columns / rows and the
    padded gamma/beta entries are zero, so padded lanes carry exact zeros."""
    dims_true = list(HIDDEN) + [out_dim]
    dims_pad = [_round_up(d, LANE) for d in HIDDEN] + \
               [_round_up(max(out_dim, LANE), LANE)]
    dout_pad = dims_pad[-1]

    kp = {}
    prev_row_pad = 0
    for i in range(1, 5):
        col_pad = dims_pad[i - 1] - dims_true[i - 1]
        kp[f"w{i}"] = jnp.pad(params[f"w{i}"],
                              ((0, prev_row_pad), (0, col_pad))).astype(jnp.bfloat16)
        kp[f"b{i}"] = jnp.pad(params[f"b{i}"], ((0, 0), (0, col_pad)))  # f32
        if i < 4:
            kp[f"g{i}"] = jnp.pad(params[f"g{i}"], ((0, 0), (0, col_pad)))
            kp[f"be{i}"] = jnp.pad(params[f"be{i}"], ((0, 0), (0, col_pad)))
        prev_row_pad = col_pad
    return kp, dout_pad


_PARAM_ORDER = ("w1", "b1", "g1", "be1",
                "w2", "b2", "g2", "be2",
                "w3", "b3", "g3", "be3",
                "w4", "b4")


def _estimate_vmem_bytes(tb, din, dout_pad, kparams, hidden_pad):
    p_bytes = sum(int(v.size) * v.dtype.itemsize for v in kparams.values())
    x_io = 2 * tb * din * 4                 # double-buffered f32 x tile
    out_io = 2 * tb * dout_pad * 2          # double-buffered bf16 out tile
    inter = tb * sum(hidden_pad) * (4 + 2) + tb * din * 2   # f32 + bf16 temps
    est = 2 * p_bytes + x_io + out_io + 2 * inter
    return min(max(int(est * 3 // 2) + (4 << 20), 8 << 20), 64 << 20)


@functools.partial(jax.jit, static_argnames=("victim_dim", "reshape", "dout_pad"))
def generator_forward(x, kparams, victim_dim, reshape, dout_pad):
    """Mirrors Generator.forward: optional flatten, fused MLP kernel, reshape out."""
    bs = x.shape[0]
    x2d = x.reshape(bs, -1) if reshape else x
    din = x2d.shape[1]

    out_dim = 1
    for v in victim_dim:
        out_dim *= v
    assert dout_pad == kparams["w4"].shape[1], (dout_pad, kparams["w4"].shape)

    # Large batch tile (few grid steps), but >=2 steps when bs allows so both
    # TensorCores are used on v7x; always a multiple of 8 sublanes.
    tb = min(MAX_TB, _round_up(pl.cdiv(bs, 2), 8))
    grid = (pl.cdiv(bs, tb),)

    hidden_pad = tuple(kparams[f"w{i}"].shape[1] for i in (1, 2, 3))
    vmem_limit = _estimate_vmem_bytes(tb, din, dout_pad, kparams, hidden_pad)

    args = (x2d,) + tuple(kparams[k] for k in _PARAM_ORDER)

    in_specs = [pl.BlockSpec((tb, din), lambda i: (i, 0))]
    # Weights / biases / LN params: constant index_map -> VMEM-resident.
    in_specs += [pl.BlockSpec(kparams[k].shape, lambda i: (0, 0))
                 for k in _PARAM_ORDER]

    kernel = functools.partial(generator_mlp_kernel, hidden_dims=HIDDEN)
    out = pl.pallas_call(
        kernel,
        out_shape=jax.ShapeDtypeStruct((bs, dout_pad), jnp.bfloat16),
        grid=grid,
        in_specs=in_specs,
        out_specs=pl.BlockSpec((tb, dout_pad), lambda i: (i, 0)),
        compiler_params=pltpu.CompilerParams(
            dimension_semantics=("parallel",),
            vmem_limit_bytes=vmem_limit),
    )(*args)

    r = out[:, :out_dim].astype(jnp.float32)
    if reshape:
        r = r.reshape((bs,) + tuple(victim_dim))
    return r


def reference_forward(x, params, victim_dim, reshape):
    """Pure-JAX f32 reference for correctness checking."""
    bs = x.shape[0]
    h = x.reshape(bs, -1) if reshape else x
    for i in range(1, 4):
        h = h @ params[f"w{i}"] + params[f"b{i}"]
        mu = jnp.mean(h, axis=-1, keepdims=True)
        var = jnp.mean((h - mu) ** 2, axis=-1, keepdims=True)
        h = (h - mu) * jax.lax.rsqrt(var + LN_EPS) * params[f"g{i}"] + params[f"be{i}"]
        h = jnp.maximum(h, 0.0)
    r = jax.nn.sigmoid(h @ params["w4"] + params["b4"])
    if reshape:
        r = r.reshape((bs,) + tuple(victim_dim))
    return r


if __name__ == "__main__":
    # Small shapes: attack_dim has len>1 so the reshape branch is exercised.
    attack_dim = (2, 8, 8)   # prod = 128
    victim_dim = (4, 8)      # prod = 32  -> MLP input = 128 + 32 = 160
    batch = 2

    key = jax.random.PRNGKey(0)
    pkey, xkey, xkey2 = jax.random.split(key, 3)
    params, input_shape, out_dim = init_generator_params(attack_dim, victim_dim, pkey)
    kparams, dout_pad = prepare_kernel_params(params, out_dim)

    # x is the per-sample concatenation of (attack_features, victim_features),
    # matching what the module's forward expects after flattening.
    x = jax.random.normal(xkey, (batch, input_shape), jnp.float32)

    out = jax.block_until_ready(
        generator_forward(x, kparams, victim_dim, True, dout_pad))
    assert out.shape == (batch,) + victim_dim, out.shape
    ref = reference_forward(x, params, victim_dim, True)
    err = float(jnp.max(jnp.abs(out - ref)))
    # bf16 matmul inputs + bf16 output (f32 accumulation) -> loosened tolerance.
    assert err < 4e-2, err

    # Second check: multi-step grid + ragged tail (bs not a multiple of tb).
    batch2 = 300
    x2 = jax.random.normal(xkey2, (batch2, input_shape), jnp.float32)
    out2 = jax.block_until_ready(
        generator_forward(x2, kparams, victim_dim, True, dout_pad))
    ref2 = reference_forward(x2, params, victim_dim, True)
    assert out2.shape == (batch2,) + victim_dim, out2.shape
    err2 = float(jnp.max(jnp.abs(out2 - ref2)))
    assert err2 < 4e-2, err2

    print("KERNEL_OK")
</pallas_src>

<mosaic_0001>
module attributes {stable_mosaic.version = 11 : i64} {
  func.func @generator_mlp_kernel(%arg0: i32, %arg1: memref<8x160xf32, #tpu.memory_space<vmem>>, %arg2: memref<160x640xbf16, #tpu.memory_space<vmem>>, %arg3: memref<1x640xf32, #tpu.memory_space<vmem>>, %arg4: memref<1x640xf32, #tpu.memory_space<vmem>>, %arg5: memref<1x640xf32, #tpu.memory_space<vmem>>, %arg6: memref<640x256xbf16, #tpu.memory_space<vmem>>, %arg7: memref<1x256xf32, #tpu.memory_space<vmem>>, %arg8: memref<1x256xf32, #tpu.memory_space<vmem>>, %arg9: memref<1x256xf32, #tpu.memory_space<vmem>>, %arg10: memref<256x128xbf16, #tpu.memory_space<vmem>>, %arg11: memref<1x128xf32, #tpu.memory_space<vmem>>, %arg12: memref<1x128xf32, #tpu.memory_space<vmem>>, %arg13: memref<1x128xf32, #tpu.memory_space<vmem>>, %arg14: memref<128x128xbf16, #tpu.memory_space<vmem>>, %arg15: memref<1x128xf32, #tpu.memory_space<vmem>>, %arg16: memref<8x128xbf16, #tpu.memory_space<vmem>>) attributes {dimension_semantics = [#tpu.dimension_semantics<parallel>], iteration_bounds = array<i64: 1>, scalar_prefetch = 0 : i64, scratch_operands = 0 : i64, tpu.core_type = #tpu.core_type<tc>, window_params = [{transform_indices = @transform_0, window_bounds = array<i64: 8, 160>}, {pipeline_mode = #tpu.pipeline_mode<synchronous>, transform_indices = @transform_1, window_bounds = array<i64: 160, 640>}, {pipeline_mode = #tpu.pipeline_mode<synchronous>, transform_indices = @transform_2, window_bounds = array<i64: 1, 640>}, {pipeline_mode = #tpu.pipeline_mode<synchronous>, transform_indices = @transform_3, window_bounds = array<i64: 1, 640>}, {pipeline_mode = #tpu.pipeline_mode<synchronous>, transform_indices = @transform_4, window_bounds = array<i64: 1, 640>}, {pipeline_mode = #tpu.pipeline_mode<synchronous>, transform_indices = @transform_5, window_bounds = array<i64: 640, 256>}, {pipeline_mode = #tpu.pipeline_mode<synchronous>, transform_indices = @transform_6, window_bounds = array<i64: 1, 256>}, {pipeline_mode = #tpu.pipeline_mode<synchronous>, transform_indices = @transform_7, window_bounds = array<i64: 1, 256>}, {pipeline_mode = #tpu.pipeline_mode<synchronous>, transform_indices = @transform_8, window_bounds = array<i64: 1, 256>}, {pipeline_mode = #tpu.pipeline_mode<synchronous>, transform_indices = @transform_9, window_bounds = array<i64: 256, 128>}, {pipeline_mode = #tpu.pipeline_mode<synchronous>, transform_indices = @transform_10, window_bounds = array<i64: 1, 128>}, {pipeline_mode = #tpu.pipeline_mode<synchronous>, transform_indices = @transform_11, window_bounds = array<i64: 1, 128>}, {pipeline_mode = #tpu.pipeline_mode<synchronous>, transform_indices = @transform_12, window_bounds = array<i64: 1, 128>}, {pipeline_mode = #tpu.pipeline_mode<synchronous>, transform_indices = @transform_13, window_bounds = array<i64: 128, 128>}, {pipeline_mode = #tpu.pipeline_mode<synchronous>, transform_indices = @transform_14, window_bounds = array<i64: 1, 128>}, {transform_indices = @transform_15, window_bounds = array<i64: 8, 128>}]} {
    %c0 = arith.constant 0 : index
    %c0_0 = arith.constant 0 : index
    %0 = vector.load %arg1[%c0, %c0_0] : memref<8x160xf32, #tpu.memory_space<vmem>>, vector<8x160xf32>
    %1 = arith.truncf %0 : vector<8x160xf32> to vector<8x160xbf16>
    %c0_1 = arith.constant 0 : index
    %c0_2 = arith.constant 0 : index
    %2 = vector.load %arg2[%c0_1, %c0_2] : memref<160x640xbf16, #tpu.memory_space<vmem>>, vector<160x640xbf16>
    %cst = arith.constant dense<0.000000e+00> : vector<8x640xf32>
    %3 = tpu.matmul %1, %2, %cst {dimension_numbers = #tpu.dot_dimension_numbers<[1], [0], [0], [1], [0, 0, 1, 1], [], []>} : vector<8x160xbf16>, vector<160x640xbf16>, vector<8x640xf32> -> vector<8x640xf32>
    %c0_3 = arith.constant 0 : index
    %c0_4 = arith.constant 0 : index
    %4 = vector.load %arg3[%c0_3, %c0_4] : memref<1x640xf32, #tpu.memory_space<vmem>>, vector<1x640xf32>
    %5 = vector.broadcast %4 : vector<1x640xf32> to vector<8x640xf32>
    %6 = arith.addf %3, %5 : vector<8x640xf32>
    %c0_5 = arith.constant 0 : index
    %c0_6 = arith.constant 0 : index
    %7 = vector.load %arg4[%c0_5, %c0_6] : memref<1x640xf32, #tpu.memory_space<vmem>>, vector<1x640xf32>
    %c0_7 = arith.constant 0 : index
    %c0_8 = arith.constant 0 : index
    %8 = vector.load %arg5[%c0_7, %c0_8] : memref<1x640xf32, #tpu.memory_space<vmem>>, vector<1x640xf32>
    %cst_9 = arith.constant dense<0.000000e+00> : vector<8xf32>
    %9 = vector.multi_reduction <add>, %6, %cst_9 [1] : vector<8x640xf32> to vector<8xf32>
    %10 = vector.shape_cast %9 : vector<8xf32> to vector<8x1xf32>
    %cst_10 = arith.constant 0.00166666671 : f32
    %11 = vector.broadcast %cst_10 : f32 to vector<8x1xf32>
    %12 = arith.mulf %10, %11 : vector<8x1xf32>
    %13 = vector.broadcast %12 : vector<8x1xf32> to vector<8x640xf32>
    %14 = arith.subf %6, %13 : vector<8x640xf32>
    %15 = tpu.iota {dimensions = array<i32: 1>} : vector<1x640xi32>
    %c600_i32 = arith.constant 600 : i32
    %16 = vector.broadcast %c600_i32 : i32 to vector<1x640xi32>
    %17 = arith.cmpi slt, %15, %16 : vector<1x640xi32>
    %18 = arith.mulf %14, %14 : vector<8x640xf32>
    %cst_11 = arith.constant 0.000000e+00 : f32
    %19 = vector.shape_cast %17 : vector<1x640xi1> to vector<1x640xi1>
    %20 = vector.broadcast %19 : vector<1x640xi1> to vector<8x640xi1>
    %21 = vector.broadcast %cst_11 : f32 to vector<8x640xf32>
    %22 = arith.select %20, %18, %21 : vector<8x640xi1>, vector<8x640xf32>
    %cst_12 = arith.constant dense<0.000000e+00> : vector<8xf32>
    %23 = vector.multi_reduction <add>, %22, %cst_12 [1] : vector<8x640xf32> to vector<8xf32>
    %24 = vector.shape_cast %23 : vector<8xf32> to vector<8x1xf32>
    %cst_13 = arith.constant 0.00166666671 : f32
    %25 = vector.broadcast %cst_13 : f32 to vector<8x1xf32>
    %26 = arith.mulf %24, %25 : vector<8x1xf32>
    %cst_14 = arith.constant 9.99999974E-6 : f32
    %27 = vector.broadcast %cst_14 : f32 to vector<8x1xf32>
    %28 = arith.addf %26, %27 : vector<8x1xf32>
    %29 = math.rsqrt %28 : vector<8x1xf32>
    %30 = vector.broadcast %29 : vector<8x1xf32> to vector<8x640xf32>
    %31 = arith.mulf %14, %30 : vector<8x640xf32>
    %32 = vector.broadcast %7 : vector<1x640xf32> to vector<8x640xf32>
    %33 = arith.mulf %31, %32 : vector<8x640xf32>
    %34 = vector.broadcast %8 : vector<1x640xf32> to vector<8x640xf32>
    %35 = arith.addf %33, %34 : vector<8x640xf32>
    %36 = arith.truncf %35 : vector<8x640xf32> to vector<8x640xbf16>
    %cst_15 = arith.constant 0.000000e+00 : bf16
    %37 = vector.broadcast %cst_15 : bf16 to vector<8x640xbf16>
    %38 = arith.maximumf %36, %37 : vector<8x640xbf16>
    %c0_16 = arith.constant 0 : index
    %c0_17 = arith.constant 0 : index
    %39 = vector.load %arg6[%c0_16, %c0_17] : memref<640x256xbf16, #tpu.memory_space<vmem>>, vector<640x256xbf16>
    %cst_18 = arith.constant dense<0.000000e+00> : vector<8x256xf32>
    %40 = tpu.matmul %38, %39, %cst_18 {dimension_numbers = #tpu.dot_dimension_numbers<[1], [0], [0], [1], [0, 0, 1, 1], [], []>} : vector<8x640xbf16>, vector<640x256xbf16>, vector<8x256xf32> -> vector<8x256xf32>
    %c0_19 = arith.constant 0 : index
    %c0_20 = arith.constant 0 : index
    %41 = vector.load %arg7[%c0_19, %c0_20] : memref<1x256xf32, #tpu.memory_space<vmem>>, vector<1x256xf32>
    %42 = vector.broadcast %41 : vector<1x256xf32> to vector<8x256xf32>
    %43 = arith.addf %40, %42 : vector<8x256xf32>
    %c0_21 = arith.constant 0 : index
    %c0_22 = arith.constant 0 : index
    %44 = vector.load %arg8[%c0_21, %c0_22] : memref<1x256xf32, #tpu.memory_space<vmem>>, vector<1x256xf32>
    %c0_23 = arith.constant 0 : index
    %c0_24 = arith.constant 0 : index
    %45 = vector.load %arg9[%c0_23, %c0_24] : memref<1x256xf32, #tpu.memory_space<vmem>>, vector<1x256xf32>
    %cst_25 = arith.constant dense<0.000000e+00> : vector<8xf32>
    %46 = vector.multi_reduction <add>, %43, %cst_25 [1] : vector<8x256xf32> to vector<8xf32>
    %47 = vector.shape_cast %46 : vector<8xf32> to vector<8x1xf32>
    %cst_26 = arith.constant 5.000000e-03 : f32
    %48 = vector.broadcast %cst_26 : f32 to vector<8x1xf32>
    %49 = arith.mulf %47, %48 : vector<8x1xf32>
    %50 = vector.broadcast %49 : vector<8x1xf32> to vector<8x256xf32>
    %51 = arith.subf %43, %50 : vector<8x256xf32>
    %52 = tpu.iota {dimensions = array<i32: 1>} : vector<1x256xi32>
    %c200_i32 = arith.constant 200 : i32
    %53 = vector.broadcast %c200_i32 : i32 to vector<1x256xi32>
    %54 = arith.cmpi slt, %52, %53 : vector<1x256xi32>
    %55 = arith.mulf %51, %51 : vector<8x256xf32>
    %cst_27 = arith.constant 0.000000e+00 : f32
    %56 = vector.shape_cast %54 : vector<1x256xi1> to vector<1x256xi1>
    %57 = vector.broadcast %56 : vector<1x256xi1> to vector<8x256xi1>
    %58 = vector.broadcast %cst_27 : f32 to vector<8x256xf32>
    %59 = arith.select %57, %55, %58 : vector<8x256xi1>, vector<8x256xf32>
    %cst_28 = arith.constant dense<0.000000e+00> : vector<8xf32>
    %60 = vector.multi_reduction <add>, %59, %cst_28 [1] : vector<8x256xf32> to vector<8xf32>
    %61 = vector.shape_cast %60 : vector<8xf32> to vector<8x1xf32>
    %cst_29 = arith.constant 5.000000e-03 : f32
    %62 = vector.broadcast %cst_29 : f32 to vector<8x1xf32>
    %63 = arith.mulf %61, %62 : vector<8x1xf32>
    %cst_30 = arith.constant 9.99999974E-6 : f32
    %64 = vector.broadcast %cst_30 : f32 to vector<8x1xf32>
    %65 = arith.addf %63, %64 : vector<8x1xf32>
    %66 = math.rsqrt %65 : vector<8x1xf32>
    %67 = vector.broadcast %66 : vector<8x1xf32> to vector<8x256xf32>
    %68 = arith.mulf %51, %67 : vector<8x256xf32>
    %69 = vector.broadcast %44 : vector<1x256xf32> to vector<8x256xf32>
    %70 = arith.mulf %68, %69 : vector<8x256xf32>
    %71 = vector.broadcast %45 : vector<1x256xf32> to vector<8x256xf32>
    %72 = arith.addf %70, %71 : vector<8x256xf32>
    %73 = arith.truncf %72 : vector<8x256xf32> to vector<8x256xbf16>
    %cst_31 = arith.constant 0.000000e+00 : bf16
    %74 = vector.broadcast %cst_31 : bf16 to vector<8x256xbf16>
    %75 = arith.maximumf %73, %74 : vector<8x256xbf16>
    %c0_32 = arith.constant 0 : index
    %c0_33 = arith.constant 0 : index
    %76 = vector.load %arg10[%c0_32, %c0_33] : memref<256x128xbf16, #tpu.memory_space<vmem>>, vector<256x128xbf16>
    %cst_34 = arith.constant dense<0.000000e+00> : vector<8x128xf32>
    %77 = tpu.matmul %75, %76, %cst_34 {dimension_numbers = #tpu.dot_dimension_numbers<[1], [0], [0], [1], [0, 0, 1, 1], [], []>} : vector<8x256xbf16>, vector<256x128xbf16>, vector<8x128xf32> -> vector<8x128xf32>
    %c0_35 = arith.constant 0 : index
    %c0_36 = arith.constant 0 : index
    %78 = vector.load %arg11[%c0_35, %c0_36] : memref<1x128xf32, #tpu.memory_space<vmem>>, vector<1x128xf32>
    %79 = vector.broadcast %78 : vector<1x128xf32> to vector<8x128xf32>
    %80 = arith.addf %77, %79 : vector<8x128xf32>
    %c0_37 = arith.constant 0 : index
    %c0_38 = arith.constant 0 : index
    %81 = vector.load %arg12[%c0_37, %c0_38] : memref<1x128xf32, #tpu.memory_space<vmem>>, vector<1x128xf32>
    %c0_39 = arith.constant 0 : index
    %c0_40 = arith.constant 0 : index
    %82 = vector.load %arg13[%c0_39, %c0_40] : memref<1x128xf32, #tpu.memory_space<vmem>>, vector<1x128xf32>
    %cst_41 = arith.constant dense<0.000000e+00> : vector<8xf32>
    %83 = vector.multi_reduction <add>, %80, %cst_41 [1] : vector<8x128xf32> to vector<8xf32>
    %84 = vector.shape_cast %83 : vector<8xf32> to vector<8x1xf32>
    %cst_42 = arith.constant 0.00999999977 : f32
    %85 = vector.broadcast %cst_42 : f32 to vector<8x1xf32>
    %86 = arith.mulf %84, %85 : vector<8x1xf32>
    %87 = vector.broadcast %86 : vector<8x1xf32> to vector<8x128xf32>
    %88 = arith.subf %80, %87 : vector<8x128xf32>
    %89 = tpu.iota {dimensions = array<i32: 1>} : vector<1x128xi32>
    %c100_i32 = arith.constant 100 : i32
    %90 = vector.broadcast %c100_i32 : i32 to vector<1x128xi32>
    %91 = arith.cmpi slt, %89, %90 : vector<1x128xi32>
    %92 = arith.mulf %88, %88 : vector<8x128xf32>
    %cst_43 = arith.constant 0.000000e+00 : f32
    %93 = vector.shape_cast %91 : vector<1x128xi1> to vector<1x128xi1>
    %94 = vector.broadcast %93 : vector<1x128xi1> to vector<8x128xi1>
    %95 = vector.broadcast %cst_43 : f32 to vector<8x128xf32>
    %96 = arith.select %94, %92, %95 : vector<8x128xi1>, vector<8x128xf32>
    %cst_44 = arith.constant dense<0.000000e+00> : vector<8xf32>
    %97 = vector.multi_reduction <add>, %96, %cst_44 [1] : vector<8x128xf32> to vector<8xf32>
    %98 = vector.shape_cast %97 : vector<8xf32> to vector<8x1xf32>
    %cst_45 = arith.constant 0.00999999977 : f32
    %99 = vector.broadcast %cst_45 : f32 to vector<8x1xf32>
    %100 = arith.mulf %98, %99 : vector<8x1xf32>
    %cst_46 = arith.constant 9.99999974E-6 : f32
    %101 = vector.broadcast %cst_46 : f32 to vector<8x1xf32>
    %102 = arith.addf %100, %101 : vector<8x1xf32>
    %103 = math.rsqrt %102 : vector<8x1xf32>
    %104 = vector.broadcast %103 : vector<8x1xf32> to vector<8x128xf32>
    %105 = arith.mulf %88, %104 : vector<8x128xf32>
    %106 = vector.broadcast %81 : vector<1x128xf32> to vector<8x128xf32>
    %107 = arith.mulf %105, %106 : vector<8x128xf32>
    %108 = vector.broadcast %82 : vector<1x128xf32> to vector<8x128xf32>
    %109 = arith.addf %107, %108 : vector<8x128xf32>
    %110 = arith.truncf %109 : vector<8x128xf32> to vector<8x128xbf16>
    %cst_47 = arith.constant 0.000000e+00 : bf16
    %111 = vector.broadcast %cst_47 : bf16 to vector<8x128xbf16>
    %112 = arith.maximumf %110, %111 : vector<8x128xbf16>
    %c0_48 = arith.constant 0 : index
    %c0_49 = arith.constant 0 : index
    %113 = vector.load %arg14[%c0_48, %c0_49] : memref<128x128xbf16, #tpu.memory_space<vmem>>, vector<128x128xbf16>
    %cst_50 = arith.constant dense<0.000000e+00> : vector<8x128xf32>
    %114 = tpu.matmul %112, %113, %cst_50 {dimension_numbers = #tpu.dot_dimension_numbers<[1], [0], [0], [1], [0, 0, 1, 1], [], []>} : vector<8x128xbf16>, vector<128x128xbf16>, vector<8x128xf32> -> vector<8x128xf32>
    %c0_51 = arith.constant 0 : index
    %c0_52 = arith.constant 0 : index
    %115 = vector.load %arg15[%c0_51, %c0_52] : memref<1x128xf32, #tpu.memory_space<vmem>>, vector<1x128xf32>
    %116 = vector.broadcast %115 : vector<1x128xf32> to vector<8x128xf32>
    %117 = arith.addf %114, %116 : vector<8x128xf32>
    %118 = arith.negf %117 : vector<8x128xf32>
    %119 = math.exp %118 : vector<8x128xf32>
    %cst_53 = arith.constant 1.000000e+00 : f32
    %120 = vector.broadcast %cst_53 : f32 to vector<8x128xf32>
    %121 = arith.addf %120, %119 : vector<8x128xf32>
    %122 = arith.divf %120, %121 : vector<8x128xf32>
    %123 = arith.truncf %122 : vector<8x128xf32> to vector<8x128xbf16>
    %c0_54 = arith.constant 0 : index
    %c0_55 = arith.constant 0 : index
    %124 = vector.load %arg16[%c0_54, %c0_55] : memref<8x128xbf16, #tpu.memory_space<vmem>>, vector<8x128xbf16>
    tpu.vector_store %arg16[%c0_54, %c0_55], %123 {strides = array<i32>} : memref<8x128xbf16, #tpu.memory_space<vmem>>, vector<8x128xbf16>,
    return
  }
  func.func @transform_0(%arg0: i32) -> (i32, i32) {
    %c0_i32 = arith.constant 0 : i32
    %c0_i32_0 = arith.constant 0 : i32
    return %arg0, %c0_i32 : i32, i32
  }
  func.func @transform_1(%arg0: i32) -> (i32, i32) {
    %c0_i32 = arith.constant 0 : i32
    %c0_i32_0 = arith.constant 0 : i32
    %c0_i32_1 = arith.constant 0 : i32
    return %c0_i32, %c0_i32_0 : i32, i32
  }
  func.func @transform_2(%arg0: i32) -> (i32, i32) {
    %c0_i32 = arith.constant 0 : i32
    %c0_i32_0 = arith.constant 0 : i32
    %c0_i32_1 = arith.constant 0 : i32
    return %c0_i32, %c0_i32_0 : i32, i32
  }
  func.func @transform_3(%arg0: i32) -> (i32, i32) {
    %c0_i32 = arith.constant 0 : i32
    %c0_i32_0 = arith.constant 0 : i32
    %c0_i32_1 = arith.constant 0 : i32
    return %c0_i32, %c0_i32_0 : i32, i32
  }
  func.func @transform_4(%arg0: i32) -> (i32, i32) {
    %c0_i32 = arith.constant 0 : i32
    %c0_i32_0 = arith.constant 0 : i32
    %c0_i32_1 = arith.constant 0 : i32
    return %c0_i32, %c0_i32_0 : i32, i32
  }
  func.func @transform_5(%arg0: i32) -> (i32, i32) {
    %c0_i32 = arith.constant 0 : i32
    %c0_i32_0 = arith.constant 0 : i32
    %c0_i32_1 = arith.constant 0 : i32
    return %c0_i32, %c0_i32_0 : i32, i32
  }
  func.func @transform_6(%arg0: i32) -> (i32, i32) {
    %c0_i32 = arith.constant 0 : i32
    %c0_i32_0 = arith.constant 0 : i32
    %c0_i32_1 = arith.constant 0 : i32
    return %c0_i32, %c0_i32_0 : i32, i32
  }
  func.func @transform_7(%arg0: i32) -> (i32, i32) {
    %c0_i32 = arith.constant 0 : i32
    %c0_i32_0 = arith.constant 0 : i32
    %c0_i32_1 = arith.constant 0 : i32
    return %c0_i32, %c0_i32_0 : i32, i32
  }
  func.func @transform_8(%arg0: i32) -> (i32, i32) {
    %c0_i32 = arith.constant 0 : i32
    %c0_i32_0 = arith.constant 0 : i32
    %c0_i32_1 = arith.constant 0 : i32
    return %c0_i32, %c0_i32_0 : i32, i32
  }
  func.func @transform_9(%arg0: i32) -> (i32, i32) {
    %c0_i32 = arith.constant 0 : i32
    %c0_i32_0 = arith.constant 0 : i32
    %c0_i32_1 = arith.constant 0 : i32
    return %c0_i32, %c0_i32_0 : i32, i32
  }
  func.func @transform_10(%arg0: i32) -> (i32, i32) {
    %c0_i32 = arith.constant 0 : i32
    %c0_i32_0 = arith.constant 0 : i32
    %c0_i32_1 = arith.constant 0 : i32
    return %c0_i32, %c0_i32_0 : i32, i32
  }
  func.func @transform_11(%arg0: i32) -> (i32, i32) {
    %c0_i32 = arith.constant 0 : i32
    %c0_i32_0 = arith.constant 0 : i32
    %c0_i32_1 = arith.constant 0 : i32
    return %c0_i32, %c0_i32_0 : i32, i32
  }
  func.func @transform_12(%arg0: i32) -> (i32, i32) {
    %c0_i32 = arith.constant 0 : i32
    %c0_i32_0 = arith.constant 0 : i32
    %c0_i32_1 = arith.constant 0 : i32
    return %c0_i32, %c0_i32_0 : i32, i32
  }
  func.func @transform_13(%arg0: i32) -> (i32, i32) {
    %c0_i32 = arith.constant 0 : i32
    %c0_i32_0 = arith.constant 0 : i32
    %c0_i32_1 = arith.constant 0 : i32
    return %c0_i32, %c0_i32_0 : i32, i32
  }
  func.func @transform_14(%arg0: i32) -> (i32, i32) {
    %c0_i32 = arith.constant 0 : i32
    %c0_i32_0 = arith.constant 0 : i32
    %c0_i32_1 = arith.constant 0 : i32
    return %c0_i32, %c0_i32_0 : i32, i32
  }
  func.func @transform_15(%arg0: i32) -> (i32, i32) {
    %c0_i32 = arith.constant 0 : i32
    %c0_i32_0 = arith.constant 0 : i32
    return %arg0, %c0_i32 : i32, i32
  }
}

</mosaic_0001>

<llo_original>
// kernel: generator_forward.1
$region0: #{generator_forward.1}
  #allocation0 [shape = 'u32[]', space=smem, size = 0x4, offset = 0x4, fixed_abs, tag = 'smem constant byte address 0x4 - core index']
  #allocation1 [shape = 'u32[144,128]{1,0:T(1,128)}', space=vmem, size = 0x12000, scoped, tag = 'internal scratch']
  %s0 = inlined_call_operand.hbm [shape: f32[2,160], index: 0, kind: input, shape index: {}]
  %s1 = inlined_call_operand.hbm [shape: bf16[160,640], index: 1, kind: input, shape index: {}]
  %s2 = inlined_call_operand.hbm [shape: f32[1,640], index: 2, kind: input, shape index: {}]
  %s3 = inlined_call_operand.vmem [shape: f32[1,640], index: 3, kind: input, shape index: {}]
  %s4 = inlined_call_operand.hbm [shape: f32[1,640], index: 4, kind: input, shape index: {}]
  %s5 = inlined_call_operand.hbm [shape: bf16[640,256], index: 5, kind: input, shape index: {}]
  %s6 = inlined_call_operand.vmem [shape: f32[1,256], index: 6, kind: input, shape index: {}]
  %s7 = inlined_call_operand.vmem [shape: f32[1,256], index: 7, kind: input, shape index: {}]
  %s8 = inlined_call_operand.hbm [shape: f32[1,256], index: 8, kind: input, shape index: {}]
  %s9 = inlined_call_operand.hbm [shape: bf16[256,128], index: 9, kind: input, shape index: {}]
  %s10 = inlined_call_operand.hbm [shape: f32[1,128], index: 10, kind: input, shape index: {}]
  %s11 = inlined_call_operand.vmem [shape: f32[1,128], index: 11, kind: input, shape index: {}]
  %s12 = inlined_call_operand.vmem [shape: f32[1,128], index: 12, kind: input, shape index: {}]
  %s13 = inlined_call_operand.hbm [shape: bf16[128,128], index: 13, kind: input, shape index: {}]
  %s14 = inlined_call_operand.hbm [shape: f32[1,128], index: 14, kind: input, shape index: {}]
  %s15 = inlined_call_operand.vmem [shape: bf16[2,128], index: 15, kind: output, shape index: {}]
  %s16 = sld [smem:[#allocation0]]
  $region140: #{generator_forward.1} parent=0
    _
  %s18 = ssub.s32 1, %s16
  %s19 = scalar_select 0, %s18, %s16
  $region1: #{generator_forward.1} parent=0
    #allocation2 [shape = 'u8[8192]{0}', space=vmem, size = 0x2000, scoped, tag = 'input window, operand 0, single buffered']
    #allocation3 [shape = 's32[1]{0}', space=sflag, size = 0x4, scoped, tag = 'scoped memory for generator_forward.1']
    #allocation4 [shape = 'u8[204800]{0}', space=vmem, size = 0x32000, scoped, tag = 'input window, operand 1, single buffered']
    #allocation5 [shape = 's32[1]{0}', space=sflag, size = 0x4, scoped, tag = 'scoped memory for generator_forward.1']
    #allocation6 [shape = 'u8[2560]{0}', space=vmem, size = 0xc00, scoped, tag = 'input window, operand 2, single buffered']
    #allocation7 [shape = 'u8[2560]{0}', space=vmem, size = 0xc00, scoped, tag = 'input window, operand 4, single buffered']
    #allocation8 [shape = 's32[1]{0}', space=sflag, size = 0x4, scoped, tag = 'scoped memory for generator_forward.1']
    #allocation9 [shape = 'u8[327680]{0}', space=vmem, size = 0x50000, scoped, tag = 'input window, operand 5, single buffered']
    #allocation10 [shape = 'u8[1024]{0}', space=vmem, size = 0x400, scoped, tag = 'input window, operand 8, single buffered']
    #allocation11 [shape = 's32[1]{0}', space=sflag, size = 0x4, scoped, tag = 'scoped memory for generator_forward.1']
    #allocation12 [shape = 'u8[65536]{0}', space=vmem, size = 0x10000, scoped, tag = 'input window, operand 9, single buffered']
    #allocation13 [shape = 'u8[512]{0}', space=vmem, size = 0x400, scoped, tag = 'input window, operand 10, single buffered']
    #allocation14 [shape = 's32[1]{0}', space=sflag, size = 0x4, scoped, tag = 'scoped memory for generator_forward.1']
    #allocation15 [shape = 'u8[32768]{0}', space=vmem, size = 0x8000, scoped, tag = 'input window, operand 13, single buffered']
    #allocation16 [shape = 'u8[512]{0}', space=vmem, size = 0x400, scoped, tag = 'input window, operand 14, single buffered']
    #allocation17 [shape = 's32[1]{0}', space=sflag, size = 0x4, scoped, tag = 'scoped memory for generator_forward.1']
    #allocation18 [shape = 'u8[2048]{0}', space=vmem, size = 0x800, scoped, tag = 'output window, operand 0, single buffered']
    %20 = vsyncpa [#allocation3], 0
    %21 = vsyncpa [#allocation5], 0
    %22 = vsyncpa [#allocation8], 0
    %23 = vsyncpa [#allocation11], 0
    %24 = vsyncpa [#allocation14], 0
    %25 = vsyncpa [#allocation17], 0
    // Predicated region
    $region2: #{generator_forward.1} parent=1 // pred_check
      _
    $region3: #{generator_forward.1} parent=1 // pred_check_branch
      %27 = sbr.rel (0) target = $region5
    $region4: #{generator_forward.1} parent=1 // pred_region
      %s29 = ssub.s32 256, 64
      %30 = vsyncadd [#allocation3], %s29
      %s31 = sshll.u32 [#allocation2], 4
      %s32 = int_to_ptr.vmem [resolvable:$true] %s31
      %37 = dma.hbm_to_vmem [thread:$0]  %s0, 64, %s32, [#allocation3], 64, 64, 4
    $region5: #{generator_forward.1} parent=1 // pred_fallthru
      _
    // Predicated region
    $region6: #{generator_forward.1} parent=1 // pred_check
      _
    $region7: #{generator_forward.1} parent=1 // pred_check_branch
      %39 = sbr.rel (0) target = $region9
    $region8: #{generator_forward.1} parent=1 // pred_region
      %s41 = ssub.s32 6400, 6400
      %42 = vsyncadd [#allocation5], %s41
      %s43 = sshll.u32 [#allocation4], 4
      %s44 = int_to_ptr.vmem [resolvable:$true] %s43
      %49 = dma.hbm_to_vmem [thread:$0]  %s1, 6400, %s44, [#allocation5], 320, 320, 20
    $region9: #{generator_forward.1} parent=1 // pred_fallthru
      _
    // Predicated region
    $region10: #{generator_forward.1} parent=1 // pred_check
      _
    $region11: #{generator_forward.1} parent=1 // pred_check_branch
      %51 = sbr.rel (0) target = $region13
    $region12: #{generator_forward.1} parent=1 // pred_region
      %s53 = ssub.s32 80, 80
      %54 = vsyncadd [#allocation5], %s53
      %s56 = sshll.u32 [#allocation6], 4
      %s57 = int_to_ptr.vmem [resolvable:$true] %s56
      %59 = dma.hbm_to_vmem [thread:$0]  %s2, 80, %s57, [#allocation5]
    $region13: #{generator_forward.1} parent=1 // pred_fallthru
      _
    // Predicated region
    $region14: #{generator_forward.1} parent=1 // pred_check
      _
    $region15: #{generator_forward.1} parent=1 // pred_check_branch
      %61 = sbr.rel (0) target = $region17
    $region16: #{generator_forward.1} parent=1 // pred_region
      _
    $region17: #{generator_forward.1} parent=1 // pred_fallthru
      _
    // Predicated region
    $region18: #{generator_forward.1} parent=1 // pred_check
      _
    $region19: #{generator_forward.1} parent=1 // pred_check_branch
      %63 = sbr.rel (0) target = $region21
    $region20: #{generator_forward.1} parent=1 // pred_region
      %s65 = ssub.s32 80, 80
      %66 = vsyncadd [#allocation8], %s65
      %s68 = sshll.u32 [#allocation7], 4
      %s69 = int_to_ptr.vmem [resolvable:$true] %s68
      %71 = dma.hbm_to_vmem [thread:$0]  %s4, 80, %s69, [#allocation8]
    $region21: #{generator_forward.1} parent=1 // pred_fallthru
      _
    // Predicated region
    $region22: #{generator_forward.1} parent=1 // pred_check
      _
    $region23: #{generator_forward.1} parent=1 // pred_check_branch
      %73 = sbr.rel (0) target = $region25
    $region24: #{generator_forward.1} parent=1 // pred_region
      %s75 = ssub.s32 10240, 10240
      %76 = vsyncadd [#allocation8], %s75
      %s77 = sshll.u32 [#allocation9], 4
      %s78 = int_to_ptr.vmem [resolvable:$true] %s77
      %83 = dma.hbm_to_vmem [thread:$0]  %s5, 10240, %s78, [#allocation8], 128, 128, 8
    $region25: #{generator_forward.1} parent=1 // pred_fallthru
      _
    // Predicated region
    $region26: #{generator_forward.1} parent=1 // pred_check
      _
    $region27: #{generator_forward.1} parent=1 // pred_check_branch
      %85 = sbr.rel (0) target = $region29
    $region28: #{generator_forward.1} parent=1 // pred_region
      _
    $region29: #{generator_forward.1} parent=1 // pred_fallthru
      _
    // Predicated region
    $region30: #{generator_forward.1} parent=1 // pred_check
      _
    $region31: #{generator_forward.1} parent=1 // pred_check_branch
      %87 = sbr.rel (0) target = $region33
    $region32: #{generator_forward.1} parent=1 // pred_region
      _
    $region33: #{generator_forward.1} parent=1 // pred_fallthru
      _
    // Predicated region
    $region34: #{generator_forward.1} parent=1 // pred_check
      _
    $region35: #{generator_forward.1} parent=1 // pred_check_branch
      %89 = sbr.rel (0) target = $region37
    $region36: #{generator_forward.1} parent=1 // pred_region
      %s91 = ssub.s32 32, 32
      %92 = vsyncadd [#allocation11], %s91
      %s94 = sshll.u32 [#allocation10], 4
      %s95 = int_to_ptr.vmem [resolvable:$true] %s94
      %97 = dma.hbm_to_vmem [thread:$0]  %s8, 32, %s95, [#allocation11]
    $region37: #{generator_forward.1} parent=1 // pred_fallthru
      _
    // Predicated region
    $region38: #{generator_forward.1} parent=1 // pred_check
      _
    $region39: #{generator_forward.1} parent=1 // pred_check_branch
      %99 = sbr.rel (0) target = $region41
    $region40: #{generator_forward.1} parent=1 // pred_region
      %s101 = ssub.s32 2048, 2048
      %102 = vsyncadd [#allocation11], %s101
      %s103 = sshll.u32 [#allocation12], 4
      %s104 = int_to_ptr.vmem [resolvable:$true] %s103
      %109 = dma.hbm_to_vmem [thread:$0]  %s9, 2048, %s104, [#allocation11], 64, 64, 4
    $region41: #{generator_forward.1} parent=1 // pred_fallthru
      _
    // Predicated region
    $region42: #{generator_forward.1} parent=1 // pred_check
      _
    $region43: #{generator_forward.1} parent=1 // pred_check_branch
      %111 = sbr.rel (0) target = $region45
    $region44: #{generator_forward.1} parent=1 // pred_region
      %s113 = ssub.s32 16, 16
      %114 = vsyncadd [#allocation14], %s113
      %s116 = sshll.u32 [#allocation13], 4
      %s117 = int_to_ptr.vmem [resolvable:$true] %s116
      %119 = dma.hbm_to_vmem [thread:$0]  %s10, 16, %s117, [#allocation14]
    $region45: #{generator_forward.1} parent=1 // pred_fallthru
      _
    // Predicated region
    $region46: #{generator_forward.1} parent=1 // pred_check
      _
    $region47: #{generator_forward.1} parent=1 // pred_check_branch
      %121 = sbr.rel (0) target = $region49
    $region48: #{generator_forward.1} parent=1 // pred_region
      _
    $region49: #{generator_forward.1} parent=1 // pred_fallthru
      _
    // Predicated region
    $region50: #{generator_forward.1} parent=1 // pred_check
      _
    $region51: #{generator_forward.1} parent=1 // pred_check_branch
      %123 = sbr.rel (0) target = $region53
    $region52: #{generator_forward.1} parent=1 // pred_region
      _
    $region53: #{generator_forward.1} parent=1 // pred_fallthru
      _
    // Predicated region
    $region54: #{generator_forward.1} parent=1 // pred_check
      _
    $region55: #{generator_forward.1} parent=1 // pred_check_branch
      %125 = sbr.rel (0) target = $region57
    $region56: #{generator_forward.1} parent=1 // pred_region
      %s127 = ssub.s32 1024, 1024
      %128 = vsyncadd [#allocation14], %s127
      %s129 = sshll.u32 [#allocation15], 4
      %s130 = int_to_ptr.vmem [resolvable:$true] %s129
      %135 = dma.hbm_to_vmem [thread:$0]  %s13, 1024, %s130, [#allocation14], 64, 64, 4
    $region57: #{generator_forward.1} parent=1 // pred_fallthru
      _
    // Predicated region
    $region58: #{generator_forward.1} parent=1 // pred_check
      _
    $region59: #{generator_forward.1} parent=1 // pred_check_branch
      %137 = sbr.rel (0) target = $region61
    $region60: #{generator_forward.1} parent=1 // pred_region
      %s139 = ssub.s32 16, 16
      %140 = vsyncadd [#allocation17], %s139
      %s142 = sshll.u32 [#allocation16], 4
      %s143 = int_to_ptr.vmem [resolvable:$true] %s142
      %145 = dma.hbm_to_vmem [thread:$0]  %s14, 16, %s143, [#allocation17]
    $region61: #{generator_forward.1} parent=1 // pred_fallthru
      _
    // Predicated region
    $region62: #{generator_forward.1} parent=1 // pred_check
      _
    $region63: #{generator_forward.1} parent=1 // pred_check_branch
      %147 = sbr.rel (0) target = $region65
    $region64: #{generator_forward.1} parent=1 // pred_region
      %148 = dma.done [#allocation3], 256
    $region65: #{generator_forward.1} parent=1 // pred_fallthru
      _
    // Predicated region
    $region66: #{generator_forward.1} parent=1 // pred_check
      _
    $region67: #{generator_forward.1} parent=1 // pred_check_branch
      %150 = sbr.rel (0) target = $region69
    $region68: #{generator_forward.1} parent=1 // pred_region
      %151 = dma.done [#allocation5], 6400
    $region69: #{generator_forward.1} parent=1 // pred_fallthru
      _
    // Predicated region
    $region70: #{generator_forward.1} parent=1 // pred_check
      _
    $region71: #{generator_forward.1} parent=1 // pred_check_branch
      %153 = sbr.rel (0) target = $region73
    $region72: #{generator_forward.1} parent=1 // pred_region
      %154 = dma.done [#allocation5], 80
    $region73: #{generator_forward.1} parent=1 // pred_fallthru
      _
    // Predicated region
    $region74: #{generator_forward.1} parent=1 // pred_check
      _
    $region75: #{generator_forward.1} parent=1 // pred_check_branch
      %156 = sbr.rel (0) target = $region77
    $region76: #{generator_forward.1} parent=1 // pred_region
      %157 = dma.done [#allocation8], 80
    $region77: #{generator_forward.1} parent=1 // pred_fallthru
      _
    // Predicated region
    $region78: #{generator_forward.1} parent=1 // pred_check
      _
    $region79: #{generator_forward.1} parent=1 // pred_check_branch
      %159 = sbr.rel (0) target = $region81
    $region80: #{generator_forward.1} parent=1 // pred_region
      %160 = dma.done [#allocation8], 10240
    $region81: #{generator_forward.1} parent=1 // pred_fallthru
      _
    // Predicated region
    $region82: #{generator_forward.1} parent=1 // pred_check
      _
    $region83: #{generator_forward.1} parent=1 // pred_check_branch
      %162 = sbr.rel (0) target = $region85
    $region84: #{generator_forward.1} parent=1 // pred_region
      %163 = dma.done [#allocation11], 32
    $region85: #{generator_forward.1} parent=1 // pred_fallthru
      _
    // Predicated region
    $region86: #{generator_forward.1} parent=1 // pred_check
      _
    $region87: #{generator_forward.1} parent=1 // pred_check_branch
      %165 = sbr.rel (0) target = $region89
    $region88: #{generator_forward.1} parent=1 // pred_region
      %166 = dma.done [#allocation11], 2048
    $region89: #{generator_forward.1} parent=1 // pred_fallthru
      _
    // Predicated region
    $region90: #{generator_forward.1} parent=1 // pred_check
      _
    $region91: #{generator_forward.1} parent=1 // pred_check_branch
      %168 = sbr.rel (0) target = $region93
    $region92: #{generator_forward.1} parent=1 // pred_region
      %169 = dma.done [#allocation14], 16
    $region93: #{generator_forward.1} parent=1 // pred_fallthru
      _
    // Predicated region
    $region94: #{generator_forward.1} parent=1 // pred_check
      _
    $region95: #{generator_forward.1} parent=1 // pred_check_branch
      %171 = sbr.rel (0) target = $region97
    $region96: #{generator_forward.1} parent=1 // pred_region
      %172 = dma.done [#allocation14], 1024
    $region97: #{generator_forward.1} parent=1 // pred_fallthru
      _
    // Predicated region
    $region98: #{generator_forward.1} parent=1 // pred_check
      _
    $region99: #{generator_forward.1} parent=1 // pred_check_branch
      %174 = sbr.rel (0) target = $region101
    $region100: #{generator_forward.1} parent=1 // pred_region
      %175 = dma.done [#allocation17], 16
    $region101: #{generator_forward.1} parent=1 // pred_fallthru
      _
    %v177 = vld [vmem:[#allocation2] sm:$0xf]
    %v178 = vld [vmem:[#allocation2 + $0x4] sm:$0xf]
    %v179 = vld [vmem:[#allocation2 + $0x8] sm:$0xf]
    %v180 = vld [vmem:[#allocation2 + $0xc] sm:$0xf]
    %v185 = vcombine.low %v177, %v178
    %v186 = vcombine.low %v179, %v180
    %v188 = vunpack.c.l.s4 1983009808
    %v189 = vunpack.c.0.s8 %v188
    %v190 = vlaneseq
    %v191 = vshrl.u32 %v190, 7
    %v192 = vsub.s32 %v189, %v191
    %v193 = vrot.slane %v185, %v192
    %v195 = vunpack.c.l.s4 1983009808
    %v196 = vunpack.c.0.s8 %v195
    %v197 = vlaneseq
    %v198 = vshrl.u32 %v197, 7
    %v199 = vsub.s32 %v196, %v198
    %v200 = vrot.slane %v186, %v199
    %v201 = vcombine.low %v193, %v200
    %v202 = vcombine.high %v193, %v200
    %v205 = vpack.c.bf16 %v201, %v201
    %v206 = vpack.c.bf16 %v202, %v202
    %v207 = vld [vmem:[#allocation4] sm:$0xff]
    %v208 = vld [vmem:[#allocation4 + $0x8] sm:$0xff]
    %v209 = vld [vmem:[#allocation4 + $0x10] sm:$0xf]
    %v210 = vld [vmem:[#allocation4 + $0x14] sm:$0xff]
    %v211 = vld [vmem:[#allocation4 + $0x1c] sm:$0xff]
    %v212 = vld [vmem:[#allocation4 + $0x24] sm:$0xf]
    %v213 = vld [vmem:[#allocation4 + $0x28] sm:$0xff]
    %v214 = vld [vmem:[#allocation4 + $0x30] sm:$0xff]
    %v215 = vld [vmem:[#allocation4 + $0x38] sm:$0xf]
    %v216 = vld [vmem:[#allocation4 + $0x3c] sm:$0xff]
    %v217 = vld [vmem:[#allocation4 + $0x44] sm:$0xff]
    %v218 = vld [vmem:[#allocation4 + $0x4c] sm:$0xf]
    %v219 = vld [vmem:[#allocation4 + $0x50] sm:$0xff]
    %v220 = vld [vmem:[#allocation4 + $0x58] sm:$0xff]
    %v221 = vld [vmem:[#allocation4 + $0x60] sm:$0xf]
    %v222 = vld [vmem:[#allocation4 + $0x64] sm:$0xff]
    %v223 = vld [vmem:[#allocation4 + $0x6c] sm:$0xff]
    %v224 = vld [vmem:[#allocation4 + $0x74] sm:$0xf]
    %v225 = vld [vmem:[#allocation4 + $0x78] sm:$0xff]
    %v226 = vld [vmem:[#allocation4 + $0x80] sm:$0xff]
    %v227 = vld [vmem:[#allocation4 + $0x88] sm:$0xf]
    %v228 = vld [vmem:[#allocation4 + $0x8c] sm:$0xff]
    %v229 = vld [vmem:[#allocation4 + $0x94] sm:$0xff]
    %v230 = vld [vmem:[#allocation4 + $0x9c] sm:$0xf]
    %v231 = vld [vmem:[#allocation4 + $0xa0] sm:$0xff]
    %v232 = vld [vmem:[#allocation4 + $0xa8] sm:$0xff]
    %v233 = vld [vmem:[#allocation4 + $0xb0] sm:$0xf]
    %v234 = vld [vmem:[#allocation4 + $0xb4] sm:$0xff]
    %v235 = vld [vmem:[#allocation4 + $0xbc] sm:$0xff]
    %v236 = vld [vmem:[#allocation4 + $0xc4] sm:$0xf]
    %v237 = vld [vmem:[#allocation4 + $0xc8] sm:$0xff]
    %v238 = vld [vmem:[#allocation4 + $0xd0] sm:$0xff]
    %v239 = vld [vmem:[#allocation4 + $0xd8] sm:$0xf]
    %v240 = vld [vmem:[#allocation4 + $0xdc] sm:$0xff]
    %v241 = vld [vmem:[#allocation4 + $0xe4] sm:$0xff]
    %v242 = vld [vmem:[#allocation4 + $0xec] sm:$0xf]
    %v243 = vld [vmem:[#allocation4 + $0xf0] sm:$0xff]
    %v244 = vld [vmem:[#allocation4 + $0xf8] sm:$0xff]
    %v245 = vld [vmem:[#allocation4 + $0x100] sm:$0xf]
    %v246 = vld [vmem:[#allocation4 + $0x104] sm:$0xff]
    %v247 = vld [vmem:[#allocation4 + $0x10c] sm:$0xff]
    %v248 = vld [vmem:[#allocation4 + $0x114] sm:$0xf]
    %v249 = vld [vmem:[#allocation4 + $0x118] sm:$0xff]
    %v250 = vld [vmem:[#allocation4 + $0x120] sm:$0xff]
    %v251 = vld [vmem:[#allocation4 + $0x128] sm:$0xf]
    %v252 = vld [vmem:[#allocation4 + $0x12c] sm:$0xff]
    %v253 = vld [vmem:[#allocation4 + $0x134] sm:$0xff]
    %v254 = vld [vmem:[#allocation4 + $0x13c] sm:$0xf]
    %v255 = vld [vmem:[#allocation4 + $0x140] sm:$0xff]
    %v256 = vld [vmem:[#allocation4 + $0x148] sm:$0xff]
    %v257 = vld [vmem:[#allocation4 + $0x150] sm:$0xf]
    %v258 = vld [vmem:[#allocation4 + $0x154] sm:$0xff]
    %v259 = vld [vmem:[#allocation4 + $0x15c] sm:$0xff]
    %v260 = vld [vmem:[#allocation4 + $0x164] sm:$0xf]
    %v261 = vld [vmem:[#allocation4 + $0x168] sm:$0xff]
    %v262 = vld [vmem:[#allocation4 + $0x170] sm:$0xff]
    %v263 = vld [vmem:[#allocation4 + $0x178] sm:$0xf]
    %v264 = vld [vmem:[#allocation4 + $0x17c] sm:$0xff]
    %v265 = vld [vmem:[#allocation4 + $0x184] sm:$0xff]
    %v266 = vld [vmem:[#allocation4 + $0x18c] sm:$0xf]
    %v267 = vld [vmem:[#allocation6] sm:$0x1f]
    %v269 = vlaneseq
    %v270 = vshrl.u32 %v269, 7
    %v271 = vsub.s32 0, %v270
    %v272 = vrot.slane %v267, %v271
    %v273 = vlaneseq
    %v274 = vshrl.u32 %v273, 7
    %v275 = vsub.s32 1, %v274
    %v276 = vrot.slane %v267, %v275
    %v277 = vlaneseq
    %v278 = vshrl.u32 %v277, 7
    %v279 = vsub.s32 2, %v278
    %v280 = vrot.slane %v267, %v279
    %v281 = vlaneseq
    %v282 = vshrl.u32 %v281, 7
    %v283 = vsub.s32 3, %v282
    %v284 = vrot.slane %v267, %v283
    %v285 = vlaneseq
    %v286 = vshrl.u32 %v285, 7
    %v287 = vsub.s32 4, %v286
    %v288 = vrot.slane %v267, %v287
    %v354 = vunpack.c.l.b16 %v207
    %v355 = vunpack.c.h.b16 %v207
    %v356 = vunpack.c.l.b16 %v208
    %v357 = vunpack.c.h.b16 %v208
    %v358 = vunpack.c.l.b16 %v209
    %v359 = vunpack.c.l.b16 %v210
    %v360 = vunpack.c.h.b16 %v210
    %v361 = vunpack.c.l.b16 %v211
    %v362 = vunpack.c.h.b16 %v211
    %v363 = vunpack.c.l.b16 %v212
    %v364 = vunpack.c.l.b16 %v213
    %v365 = vunpack.c.h.b16 %v213
    %v366 = vunpack.c.l.b16 %v214
    %v367 = vunpack.c.h.b16 %v214
    %v368 = vunpack.c.l.b16 %v215
    %v369 = vunpack.c.l.b16 %v216
    %v370 = vunpack.c.h.b16 %v216
    %v371 = vunpack.c.l.b16 %v217
    %v372 = vunpack.c.h.b16 %v217
    %v373 = vunpack.c.l.b16 %v218
    %v374 = vunpack.c.l.b16 %v219
    %v375 = vunpack.c.h.b16 %v219
    %v376 = vunpack.c.l.b16 %v220
    %v377 = vunpack.c.h.b16 %v220
    %v378 = vunpack.c.l.b16 %v221
    %v379 = vunpack.c.l.b16 %v222
    %v380 = vunpack.c.h.b16 %v222
    %v381 = vunpack.c.l.b16 %v223
    %v382 = vunpack.c.h.b16 %v223
    %v383 = vunpack.c.l.b16 %v224
    %v384 = vunpack.c.l.b16 %v225
    %v385 = vunpack.c.h.b16 %v225
    %v386 = vunpack.c.l.b16 %v226
    %v387 = vunpack.c.h.b16 %v226
    %v388 = vunpack.c.l.b16 %v227
    %v389 = vunpack.c.l.b16 %v228
    %v390 = vunpack.c.h.b16 %v228
    %v391 = vunpack.c.l.b16 %v229
    %v392 = vunpack.c.h.b16 %v229
    %v393 = vunpack.c.l.b16 %v230
    %v394 = vunpack.c.l.b16 %v231
    %v395 = vunpack.c.h.b16 %v231
    %v396 = vunpack.c.l.b16 %v232
    %v397 = vunpack.c.h.b16 %v232
    %v398 = vunpack.c.l.b16 %v233
    %v399 = vunpack.c.l.b16 %v234
    %v400 = vunpack.c.h.b16 %v234
    %v401 = vunpack.c.l.b16 %v235
    %v402 = vunpack.c.h.b16 %v235
    %v403 = vunpack.c.l.b16 %v236
    %v404 = vunpack.c.l.b16 %v237
    %v405 = vunpack.c.h.b16 %v237
    %v406 = vunpack.c.l.b16 %v238
    %v407 = vunpack.c.h.b16 %v238
    %v408 = vunpack.c.l.b16 %v239
    %v409 = vunpack.c.l.b16 %v240
    %v410 = vunpack.c.h.b16 %v240
    %v411 = vunpack.c.l.b16 %v241
    %v412 = vunpack.c.h.b16 %v241
    %v413 = vunpack.c.l.b16 %v242
    %v414 = vunpack.c.l.b16 %v243
    %v415 = vunpack.c.h.b16 %v243
    %v416 = vunpack.c.l.b16 %v244
    %v417 = vunpack.c.h.b16 %v244
    %v418 = vunpack.c.l.b16 %v245
    %v419 = vunpack.c.l.b16 %v246
    %v420 = vunpack.c.h.b16 %v246
    %v421 = vunpack.c.l.b16 %v247
    %v422 = vunpack.c.h.b16 %v247
    %v423 = vunpack.c.l.b16 %v248
    %v424 = vunpack.c.l.b16 %v249
    %v425 = vunpack.c.h.b16 %v249
    %v426 = vunpack.c.l.b16 %v250
    %v427 = vunpack.c.h.b16 %v250
    %v428 = vunpack.c.l.b16 %v251
    %v429 = vunpack.c.l.b16 %v252
    %v430 = vunpack.c.h.b16 %v252
    %v431 = vunpack.c.l.b16 %v253
    %v432 = vunpack.c.h.b16 %v253
    %v433 = vunpack.c.l.b16 %v254
    %v434 = vunpack.c.l.b16 %v255
    %v435 = vunpack.c.h.b16 %v255
    %v436 = vunpack.c.l.b16 %v256
    %v437 = vunpack.c.h.b16 %v256
    %v438 = vunpack.c.l.b16 %v257
    %v439 = vunpack.c.l.b16 %v258
    %v440 = vunpack.c.h.b16 %v258
    %v441 = vunpack.c.l.b16 %v259
    %v442 = vunpack.c.h.b16 %v259
    %v443 = vunpack.c.l.b16 %v260
    %v444 = vunpack.c.l.b16 %v261
    %v445 = vunpack.c.h.b16 %v261
    %v446 = vunpack.c.l.b16 %v262
    %v447 = vunpack.c.h.b16 %v262
    %v448 = vunpack.c.l.b16 %v263
    %v449 = vunpack.c.l.b16 %v264
    %v450 = vunpack.c.h.b16 %v264
    %v451 = vunpack.c.l.b16 %v265
    %v452 = vunpack.c.h.b16 %v265
    %v453 = vunpack.c.l.b16 %v266
    %v454 = vpack.c.b16 %v359, %v354
    %v455 = vpack.c.b16 %v360, %v355
    %v456 = vpack.c.b16 %v361, %v356
    %v457 = vpack.c.b16 %v362, %v357
    %v458 = vpack.c.b16 %v363, %v358
    %v459 = vpack.c.b16 %v369, %v364
    %v460 = vpack.c.b16 %v370, %v365
    %v461 = vpack.c.b16 %v371, %v366
    %v462 = vpack.c.b16 %v372, %v367
    %v463 = vpack.c.b16 %v373, %v368
    %v464 = vpack.c.b16 %v379, %v374
    %v465 = vpack.c.b16 %v380, %v375
    %v466 = vpack.c.b16 %v381, %v376
    %v467 = vpack.c.b16 %v382, %v377
    %v468 = vpack.c.b16 %v383, %v378
    %v469 = vpack.c.b16 %v389, %v384
    %v470 = vpack.c.b16 %v390, %v385
    %v471 = vpack.c.b16 %v391, %v386
    %v472 = vpack.c.b16 %v392, %v387
    %v473 = vpack.c.b16 %v393, %v388
    %v474 = vpack.c.b16 %v399, %v394
    %v475 = vpack.c.b16 %v400, %v395
    %v476 = vpack.c.b16 %v401, %v396
    %v477 = vpack.c.b16 %v402, %v397
    %v478 = vpack.c.b16 %v403, %v398
    %v479 = vpack.c.b16 %v409, %v404
    %v480 = vpack.c.b16 %v410, %v405
    %v481 = vpack.c.b16 %v411, %v406
    %v482 = vpack.c.b16 %v412, %v407
    %v483 = vpack.c.b16 %v413, %v408
    %v484 = vpack.c.b16 %v419, %v414
    %v485 = vpack.c.b16 %v420, %v415
    %v486 = vpack.c.b16 %v421, %v416
    %v487 = vpack.c.b16 %v422, %v417
    %v488 = vpack.c.b16 %v423, %v418
    %v489 = vpack.c.b16 %v429, %v424
    %v490 = vpack.c.b16 %v430, %v425
    %v491 = vpack.c.b16 %v431, %v426
    %v492 = vpack.c.b16 %v432, %v427
    %v493 = vpack.c.b16 %v433, %v428
    %v494 = vpack.c.b16 %v439, %v434
    %v495 = vpack.c.b16 %v440, %v435
    %v496 = vpack.c.b16 %v441, %v436
    %v497 = vpack.c.b16 %v442, %v437
    %v498 = vpack.c.b16 %v443, %v438
    %v499 = vpack.c.b16 %v449, %v444
    %v500 = vpack.c.b16 %v450, %v445
    %v501 = vpack.c.b16 %v451, %v446
    %v502 = vpack.c.b16 %v452, %v447
    %v503 = vpack.c.b16 %v453, %v448
    %vm554 = vcmask 261120
    %v556 = vsel %vm554, %v206, 0
    %558 = vmatprep.subr.bf16.mxu0 %v490
    %559 = vmatpush1.bf16.msra.mxu0 %v489
    %560 = vmatprep.subr.bf16.mxu0 %v485
    %561 = vmatpush1.bf16.msra.mxu0 %v484
    %562 = vmatprep.subr.bf16.mxu0 %v480
    %563 = vmatpush1.bf16.msra.mxu0 %v479
    %564 = vmatprep.subr.bf16.mxu0 %v475
    %565 = vmatpush1.bf16.msra.mxu0 %v474
    %566 = vmatprep.subr.bf16.mxu0 %v470
    %567 = vmatpush1.bf16.msra.mxu0 %v469
    %568 = vmatprep.subr.bf16.mxu0 %v465
    %569 = vmatpush1.bf16.msra.mxu0 %v464
    %570 = vmatprep.subr.bf16.mxu0 %v460
    %571 = vmatpush1.bf16.msra.mxu0 %v459
    %572 = vmatprep.subr.bf16.mxu0 %v455
    %573 = vmatpush1.bf16.msra.mxu0 %v454
    %574 = vmatprep.subr.bf16.mxu0 0
    %575 = vmatpush2.bf16.msra.mxu0 0
    %576 = vmatprep.subr.bf16.mxu0 0
    %577 = vmatpush2.bf16.msra.mxu0 0
    %578 = vmatprep.subr.bf16.mxu0 0
    %579 = vmatpush2.bf16.msra.mxu0 0
    %580 = vmatprep.subr.bf16.mxu0 0
    %581 = vmatpush2.bf16.msra.mxu0 0
    %582 = vmatprep.subr.bf16.mxu0 0
    %583 = vmatpush2.bf16.msra.mxu0 0
    %584 = vmatprep.subr.bf16.mxu0 0
    %585 = vmatpush2.bf16.msra.mxu0 0
    %586 = vmatprep.subr.bf16.mxu0 %v500
    %587 = vmatpush2.bf16.msra.mxu0 %v499
    %588 = vmatprep.subr.bf16.mxu0 %v495
    %589 = vmatpush2.bf16.msra.mxu0 %v494
    %590 = vmatprep.mubr.bf16.mxu0 %v556
    %591 = vmatmul.mubr.bf16.gmra.mxu0 %v205
    %v592 = vpop.f32.mrf.mxu0
    %v593 = vadd.f32 %v272, %v592
    %v594 = vpop.f32.mrf.mxu0
    %v595 = vadd.f32 %v276, %v594
    %v596 = vpop.f32.mrf.mxu0
    %v597 = vpop.f32.mrf.mxu0
    %598 = vdwg.mxu0
    %599 = vmatprep.subr.bf16.mxu0 %v492
    %600 = vmatpush1.bf16.msra.mxu0 %v491
    %601 = vmatprep.subr.bf16.mxu0 %v487
    %602 = vmatpush1.bf16.msra.mxu0 %v486
    %603 = vmatprep.subr.bf16.mxu0 %v482
    %604 = vmatpush1.bf16.msra.mxu0 %v481
    %605 = vmatprep.subr.bf16.mxu0 %v477
    %606 = vmatpush1.bf16.msra.mxu0 %v476
    %607 = vmatprep.subr.bf16.mxu0 %v472
    %608 = vmatpush1.bf16.msra.mxu0 %v471
    %609 = vmatprep.subr.bf16.mxu0 %v467
    %610 = vmatpush1.bf16.msra.mxu0 %v466
    %611 = vmatprep.subr.bf16.mxu0 %v462
    %612 = vmatpush1.bf16.msra.mxu0 %v461
    %613 = vmatprep.subr.bf16.mxu0 %v457
    %614 = vmatpush1.bf16.msra.mxu0 %v456
    %615 = vmatprep.subr.bf16.mxu0 0
    %616 = vmatpush2.bf16.msra.mxu0 0
    %617 = vmatprep.subr.bf16.mxu0 0
    %618 = vmatpush2.bf16.msra.mxu0 0
    %619 = vmatprep.subr.bf16.mxu0 0
    %620 = vmatpush2.bf16.msra.mxu0 0
    %621 = vmatprep.subr.bf16.mxu0 0
    %622 = vmatpush2.bf16.msra.mxu0 0
    %623 = vmatprep.subr.bf16.mxu0 0
    %624 = vmatpush2.bf16.msra.mxu0 0
    %625 = vmatprep.subr.bf16.mxu0 0
    %626 = vmatpush2.bf16.msra.mxu0 0
    %627 = vmatprep.subr.bf16.mxu0 %v502
    %628 = vmatpush2.bf16.msra.mxu0 %v501
    %629 = vmatprep.subr.bf16.mxu0 %v497
    %630 = vmatpush2.bf16.msra.mxu0 %v496
    %631 = vmatprep.mubr.bf16.mxu0 %v556
    %632 = vmatmul.mubr.bf16.gmra.mxu0 %v205
    %v633 = vpop.f32.mrf.mxu0
    %v634 = vadd.f32 %v280, %v633
    %v635 = vpop.f32.mrf.mxu0
    %v636 = vadd.f32 %v284, %v635
    %v637 = vpop.f32.mrf.mxu0
    %v638 = vpop.f32.mrf.mxu0
    %639 = vdwg.mxu0
    %640 = vmatprep.subr.bf16.mxu0 0
    %641 = vmatpush1.bf16.msra.mxu0 %v493
    %642 = vmatprep.subr.bf16.mxu0 0
    %643 = vmatpush1.bf16.msra.mxu0 %v488
    %644 = vmatprep.subr.bf16.mxu0 0
    %645 = vmatpush1.bf16.msra.mxu0 %v483
    %646 = vmatprep.subr.bf16.mxu0 0
    %647 = vmatpush1.bf16.msra.mxu0 %v478
    %648 = vmatprep.subr.bf16.mxu0 0
    %649 = vmatpush1.bf16.msra.mxu0 %v473
    %650 = vmatprep.subr.bf16.mxu0 0
    %651 = vmatpush1.bf16.msra.mxu0 %v468
    %652 = vmatprep.subr.bf16.mxu0 0
    %653 = vmatpush1.bf16.msra.mxu0 %v463
    %654 = vmatprep.subr.bf16.mxu0 0
    %655 = vmatpush1.bf16.msra.mxu0 %v458
    %656 = vmatprep.subr.bf16.mxu0 0
    %657 = vmatpush2.bf16.msra.mxu0 0
    %658 = vmatprep.subr.bf16.mxu0 0
    %659 = vmatpush2.bf16.msra.mxu0 0
    %660 = vmatprep.subr.bf16.mxu0 0
    %661 = vmatpush2.bf16.msra.mxu0 0
    %662 = vmatprep.subr.bf16.mxu0 0
    %663 = vmatpush2.bf16.msra.mxu0 0
    %664 = vmatprep.subr.bf16.mxu0 0
    %665 = vmatpush2.bf16.msra.mxu0 0
    %666 = vmatprep.subr.bf16.mxu0 0
    %667 = vmatpush2.bf16.msra.mxu0 0
    %668 = vmatprep.subr.bf16.mxu0 0
    %669 = vmatpush2.bf16.msra.mxu0 %v503
    %670 = vmatprep.subr.bf16.mxu0 0
    %671 = vmatpush2.bf16.msra.mxu0 %v498
    %672 = vmatprep.mubr.bf16.mxu0 %v556
    %673 = vmatmul.mubr.bf16.gmra.mxu0 %v205
    %v674 = vpop.f32.mrf.mxu0
    %v675 = vadd.f32 %v288, %v674
    %v676 = vpop.f32.mrf.mxu0
    %v677 = vpop.f32.mrf.mxu0
    %v678 = vpop.f32.mrf.mxu0
    %679 = vdwg.mxu0
    %v680 = vld [vmem:[%s3] sm:$0x1f]
    %v681 = vld [vmem:[#allocation7] sm:$0x1f]
    %v682 = vadd.f32 %v593, %v595
    %v683 = vadd.f32 %v682, %v634
    %v684 = vadd.f32 %v683, %v636
    %v685 = vadd.f32 %v684, %v675
    %686 = vadd.xlane.f32.xlu0 %v685
    %v687 = vpop.xlane.xlu0 %686
    %v688 = vmul.f32 %v687, 0.0016666667
    %v689 = vsub.f32 %v593, %v688
    %v690 = vsub.f32 %v595, %v688
    %v691 = vsub.f32 %v634, %v688
    %v692 = vsub.f32 %v636, %v688
    %v693 = vsub.f32 %v675, %v688
    %v694 = vlaneseq
    %v695 = vand.u32 %v694, 127
    %v696 = vadd.s32 %v695, 128
    %v697 = vadd.s32 %v695, 256
    %v698 = vadd.s32 %v695, 384
    %v699 = vadd.s32 %v695, 512
    %vm700 = vcmp.lt.s32.totalorder %v695, 600
    %vm701 = vcmp.lt.s32.totalorder %v696, 600
    %vm702 = vcmp.lt.s32.totalorder %v697, 600
    %vm703 = vcmp.lt.s32.totalorder %v698, 600
    %vm704 = vcmp.lt.s32.totalorder %v699, 600
    %v705 = vmul.f32 %v689, %v689
    %v706 = vmul.f32 %v690, %v690
    %v707 = vmul.f32 %v691, %v691
    %v708 = vmul.f32 %v692, %v692
    %v709 = vmul.f32 %v693, %v693
    %v710 = vsel %vm700, 1, 0
    %v711 = vsel %vm701, 1, 0
    %v712 = vsel %vm702, 1, 0
    %v713 = vsel %vm703, 1, 0
    %v714 = vsel %vm704, 1, 0
    %vm715 = vcmp.eq.s32.totalorder %v710, 1
    %vm716 = vcmp.eq.s32.totalorder %v711, 1
    %vm717 = vcmp.eq.s32.totalorder %v712, 1
    %vm718 = vcmp.eq.s32.totalorder %v713, 1
    %vm719 = vcmp.eq.s32.totalorder %v714, 1
    %v720 = vsel %vm715, %v705, 0.0
    %v721 = vsel %vm716, %v706, 0.0
    %v722 = vsel %vm717, %v707, 0.0
    %v723 = vsel %vm718, %v708, 0.0
    %v724 = vsel %vm719, %v709, 0.0
    %v725 = vadd.f32 %v720, %v721
    %v726 = vadd.f32 %v725, %v722
    %v727 = vadd.f32 %v726, %v723
    %v728 = vadd.f32 %v727, %v724
    %729 = vadd.xlane.f32.xlu0 %v728
    %v730 = vpop.xlane.xlu0 %729
    %v731 = vmul.f32 %v730, 0.0016666667
    %v732 = vadd.f32 %v731, 1e-05
    %v733 = vrsqrt.pop %v732
    %v734 = vmul.f32 %v689, %v733
    %v735 = vmul.f32 %v690, %v733
    %v736 = vmul.f32 %v691, %v733
    %v737 = vmul.f32 %v692, %v733
    %v738 = vmul.f32 %v693, %v733
    %v740 = vlaneseq
    %v741 = vshrl.u32 %v740, 7
    %v742 = vsub.s32 0, %v741
    %v743 = vrot.slane %v680, %v742
    %v744 = vlaneseq
    %v745 = vshrl.u32 %v744, 7
    %v746 = vsub.s32 1, %v745
    %v747 = vrot.slane %v680, %v746
    %v748 = vlaneseq
    %v749 = vshrl.u32 %v748, 7
    %v750 = vsub.s32 2, %v749
    %v751 = vrot.slane %v680, %v750
    %v752 = vlaneseq
    %v753 = vshrl.u32 %v752, 7
    %v754 = vsub.s32 3, %v753
    %v755 = vrot.slane %v680, %v754
    %v756 = vlaneseq
    %v757 = vshrl.u32 %v756, 7
    %v758 = vsub.s32 4, %v757
    %v759 = vrot.slane %v680, %v758
    %v765 = vmul.f32 %v734, %v743
    %v766 = vmul.f32 %v735, %v747
    %v767 = vmul.f32 %v736, %v751
    %v768 = vmul.f32 %v737, %v755
    %v769 = vmul.f32 %v738, %v759
    %v771 = vlaneseq
    %v772 = vshrl.u32 %v771, 7
    %v773 = vsub.s32 0, %v772
    %v774 = vrot.slane %v681, %v773
    %v775 = vlaneseq
    %v776 = vshrl.u32 %v775, 7
    %v777 = vsub.s32 1, %v776
    %v778 = vrot.slane %v681, %v777
    %v779 = vlaneseq
    %v780 = vshrl.u32 %v779, 7
    %v781 = vsub.s32 2, %v780
    %v782 = vrot.slane %v681, %v781
    %v783 = vlaneseq
    %v784 = vshrl.u32 %v783, 7
    %v785 = vsub.s32 3, %v784
    %v786 = vrot.slane %v681, %v785
    %v787 = vlaneseq
    %v788 = vshrl.u32 %v787, 7
    %v789 = vsub.s32 4, %v788
    %v790 = vrot.slane %v681, %v789
    %v796 = vadd.f32 %v765, %v774
    %v797 = vadd.f32 %v766, %v778
    %v798 = vadd.f32 %v767, %v782
    %v799 = vadd.f32 %v768, %v786
    %v800 = vadd.f32 %v769, %v790
    %v801 = vpack.c.bf16 %v796, %v796
    %v802 = vpack.c.bf16 %v797, %v797
    %v803 = vpack.c.bf16 %v798, %v798
    %v804 = vpack.c.bf16 %v799, %v799
    %v805 = vpack.c.bf16 %v800, %v800
    %v806 = vmax.bf16 %v801, 0
    %v807 = vmax.bf16 %v802, 0
    %v808 = vmax.bf16 %v803, 0
    %v809 = vmax.bf16 %v804, 0
    %v810 = vmax.bf16 %v805, 0
    %v811 = vld [vmem:[#allocation9] sm:$0xff]
    %v812 = vld [vmem:[#allocation9 + $0x8] sm:$0xff]
    %v813 = vld [vmem:[#allocation9 + $0x10] sm:$0xff]
    %v814 = vld [vmem:[#allocation9 + $0x18] sm:$0xff]
    %v815 = vld [vmem:[#allocation9 + $0x20] sm:$0xff]
    %v816 = vld [vmem:[#allocation9 + $0x28] sm:$0xff]
    %v817 = vld [vmem:[#allocation9 + $0x30] sm:$0xff]
    %v818 = vld [vmem:[#allocation9 + $0x38] sm:$0xff]
    %v819 = vld [vmem:[#allocation9 + $0x40] sm:$0xff]
    %v820 = vld [vmem:[#allocation9 + $0x48] sm:$0xff]
    %v821 = vld [vmem:[#allocation9 + $0x50] sm:$0xff]
    %v822 = vld [vmem:[#allocation9 + $0x58] sm:$0xff]
    %v823 = vld [vmem:[#allocation9 + $0x60] sm:$0xff]
    %v824 = vld [vmem:[#allocation9 + $0x68] sm:$0xff]
    %v825 = vld [vmem:[#allocation9 + $0x70] sm:$0xff]
    %v826 = vld [vmem:[#allocation9 + $0x78] sm:$0xff]
    %v827 = vld [vmem:[#allocation9 + $0x80] sm:$0xff]
    %v828 = vld [vmem:[#allocation9 + $0x88] sm:$0xff]
    %v829 = vld [vmem:[#allocation9 + $0x90] sm:$0xff]
    %v830 = vld [vmem:[#allocation9 + $0x98] sm:$0xff]
    %v831 = vld [vmem:[#allocation9 + $0xa0] sm:$0xff]
    %v832 = vld [vmem:[#allocation9 + $0xa8] sm:$0xff]
    %v833 = vld [vmem:[#allocation9 + $0xb0] sm:$0xff]
    %v834 = vld [vmem:[#allocation9 + $0xb8] sm:$0xff]
    %v835 = vld [vmem:[#allocation9 + $0xc0] sm:$0xff]
    %v836 = vld [vmem:[#allocation9 + $0xc8] sm:$0xff]
    %v837 = vld [vmem:[#allocation9 + $0xd0] sm:$0xff]
    %v838 = vld [vmem:[#allocation9 + $0xd8] sm:$0xff]
    %v839 = vld [vmem:[#allocation9 + $0xe0] sm:$0xff]
    %v840 = vld [vmem:[#allocation9 + $0xe8] sm:$0xff]
    %v841 = vld [vmem:[#allocation9 + $0xf0] sm:$0xff]
    %v842 = vld [vmem:[#allocation9 + $0xf8] sm:$0xff]
    %v843 = vld [vmem:[#allocation9 + $0x100] sm:$0xff]
    %v844 = vld [vmem:[#allocation9 + $0x108] sm:$0xff]
    %v845 = vld [vmem:[#allocation9 + $0x110] sm:$0xff]
    %v846 = vld [vmem:[#allocation9 + $0x118] sm:$0xff]
    %v847 = vld [vmem:[#allocation9 + $0x120] sm:$0xff]
    %v848 = vld [vmem:[#allocation9 + $0x128] sm:$0xff]
    %v849 = vld [vmem:[#allocation9 + $0x130] sm:$0xff]
    %v850 = vld [vmem:[#allocation9 + $0x138] sm:$0xff]
    %v851 = vld [vmem:[#allocation9 + $0x140] sm:$0xff]
    %v852 = vld [vmem:[#allocation9 + $0x148] sm:$0xff]
    %v853 = vld [vmem:[#allocation9 + $0x150] sm:$0xff]
    %v854 = vld [vmem:[#allocation9 + $0x158] sm:$0xff]
    %v855 = vld [vmem:[#allocation9 + $0x160] sm:$0xff]
    %v856 = vld [vmem:[#allocation9 + $0x168] sm:$0xff]
    %v857 = vld [vmem:[#allocation9 + $0x170] sm:$0xff]
    %v858 = vld [vmem:[#allocation9 + $0x178] sm:$0xff]
    %v859 = vld [vmem:[#allocation9 + $0x180] sm:$0xff]
    %v860 = vld [vmem:[#allocation9 + $0x188] sm:$0xff]
    %v861 = vld [vmem:[#allocation9 + $0x190] sm:$0xff]
    %v862 = vld [vmem:[#allocation9 + $0x198] sm:$0xff]
    %v863 = vld [vmem:[#allocation9 + $0x1a0] sm:$0xff]
    %v864 = vld [vmem:[#allocation9 + $0x1a8] sm:$0xff]
    %v865 = vld [vmem:[#allocation9 + $0x1b0] sm:$0xff]
    %v866 = vld [vmem:[#allocation9 + $0x1b8] sm:$0xff]
    %v867 = vld [vmem:[#allocation9 + $0x1c0] sm:$0xff]
    %v868 = vld [vmem:[#allocation9 + $0x1c8] sm:$0xff]
    %v869 = vld [vmem:[#allocation9 + $0x1d0] sm:$0xff]
    %v870 = vld [vmem:[#allocation9 + $0x1d8] sm:$0xff]
    %v871 = vld [vmem:[#allocation9 + $0x1e0] sm:$0xff]
    %v872 = vld [vmem:[#allocation9 + $0x1e8] sm:$0xff]
    %v873 = vld [vmem:[#allocation9 + $0x1f0] sm:$0xff]
    %v874 = vld [vmem:[#allocation9 + $0x1f8] sm:$0xff]
    %v875 = vld [vmem:[#allocation9 + $0x200] sm:$0xff]
    %v876 = vld [vmem:[#allocation9 + $0x208] sm:$0xff]
    %v877 = vld [vmem:[#allocation9 + $0x210] sm:$0xff]
    %v878 = vld [vmem:[#allocation9 + $0x218] sm:$0xff]
    %v879 = vld [vmem:[#allocation9 + $0x220] sm:$0xff]
    %v880 = vld [vmem:[#allocation9 + $0x228] sm:$0xff]
    %v881 = vld [vmem:[#allocation9 + $0x230] sm:$0xff]
    %v882 = vld [vmem:[#allocation9 + $0x238] sm:$0xff]
    %v883 = vld [vmem:[#allocation9 + $0x240] sm:$0xff]
    %v884 = vld [vmem:[#allocation9 + $0x248] sm:$0xff]
    %v885 = vld [vmem:[#allocation9 + $0x250] sm:$0xff]
    %v886 = vld [vmem:[#allocation9 + $0x258] sm:$0xff]
    %v887 = vld [vmem:[#allocation9 + $0x260] sm:$0xff]
    %v888 = vld [vmem:[#allocation9 + $0x268] sm:$0xff]
    %v889 = vld [vmem:[#allocation9 + $0x270] sm:$0xff]
    %v890 = vld [vmem:[#allocation9 + $0x278] sm:$0xff]
    %v891 = vld [vmem:[%s6] sm:$0x3]
    %v893 = vlaneseq
    %v894 = vshrl.u32 %v893, 7
    %v895 = vsub.s32 0, %v894
    %v896 = vrot.slane %v891, %v895
    %v897 = vlaneseq
    %v898 = vshrl.u32 %v897, 7
    %v899 = vsub.s32 1, %v898
    %v900 = vrot.slane %v891, %v899
    %v983 = vunpack.c.l.b16 %v811
    %v984 = vunpack.c.h.b16 %v811
    %v985 = vunpack.c.l.b16 %v812
    %v986 = vunpack.c.h.b16 %v812
    %v987 = vunpack.c.l.b16 %v813
    %v988 = vunpack.c.h.b16 %v813
    %v989 = vunpack.c.l.b16 %v814
    %v990 = vunpack.c.h.b16 %v814
    %v991 = vunpack.c.l.b16 %v815
    %v992 = vunpack.c.h.b16 %v815
    %v993 = vunpack.c.l.b16 %v816
    %v994 = vunpack.c.h.b16 %v816
    %v995 = vunpack.c.l.b16 %v817
    %v996 = vunpack.c.h.b16 %v817
    %v997 = vunpack.c.l.b16 %v818
    %v998 = vunpack.c.h.b16 %v818
    %v999 = vunpack.c.l.b16 %v819
    %v1000 = vunpack.c.h.b16 %v819
    %v1001 = vunpack.c.l.b16 %v820
    %v1002 = vunpack.c.h.b16 %v820
    %v1003 = vunpack.c.l.b16 %v821
    %v1004 = vunpack.c.h.b16 %v821
    %v1005 = vunpack.c.l.b16 %v822
    %v1006 = vunpack.c.h.b16 %v822
    %v1007 = vunpack.c.l.b16 %v823
    %v1008 = vunpack.c.h.b16 %v823
    %v1009 = vunpack.c.l.b16 %v824
    %v1010 = vunpack.c.h.b16 %v824
    %v1011 = vunpack.c.l.b16 %v825
    %v1012 = vunpack.c.h.b16 %v825
    %v1013 = vunpack.c.l.b16 %v826
    %v1014 = vunpack.c.h.b16 %v826
    %v1015 = vunpack.c.l.b16 %v827
    %v1016 = vunpack.c.h.b16 %v827
    %v1017 = vunpack.c.l.b16 %v828
    %v1018 = vunpack.c.h.b16 %v828
    %v1019 = vunpack.c.l.b16 %v829
    %v1020 = vunpack.c.h.b16 %v829
    %v1021 = vunpack.c.l.b16 %v830
    %v1022 = vunpack.c.h.b16 %v830
    %v1023 = vunpack.c.l.b16 %v831
    %v1024 = vunpack.c.h.b16 %v831
    %v1025 = vunpack.c.l.b16 %v832
    %v1026 = vunpack.c.h.b16 %v832
    %v1027 = vunpack.c.l.b16 %v833
    %v1028 = vunpack.c.h.b16 %v833
    %v1029 = vunpack.c.l.b16 %v834
    %v1030 = vunpack.c.h.b16 %v834
    %v1031 = vunpack.c.l.b16 %v835
    %v1032 = vunpack.c.h.b16 %v835
    %v1033 = vunpack.c.l.b16 %v836
    %v1034 = vunpack.c.h.b16 %v836
    %v1035 = vunpack.c.l.b16 %v837
    %v1036 = vunpack.c.h.b16 %v837
    %v1037 = vunpack.c.l.b16 %v838
    %v1038 = vunpack.c.h.b16 %v838
    %v1039 = vunpack.c.l.b16 %v839
    %v1040 = vunpack.c.h.b16 %v839
    %v1041 = vunpack.c.l.b16 %v840
    %v1042 = vunpack.c.h.b16 %v840
    %v1043 = vunpack.c.l.b16 %v841
    %v1044 = vunpack.c.h.b16 %v841
    %v1045 = vunpack.c.l.b16 %v842
    %v1046 = vunpack.c.h.b16 %v842
    %v1047 = vunpack.c.l.b16 %v843
    %v1048 = vunpack.c.h.b16 %v843
    %v1049 = vunpack.c.l.b16 %v844
    %v1050 = vunpack.c.h.b16 %v844
    %v1051 = vunpack.c.l.b16 %v845
    %v1052 = vunpack.c.h.b16 %v845
    %v1053 = vunpack.c.l.b16 %v846
    %v1054 = vunpack.c.h.b16 %v846
    %v1055 = vunpack.c.l.b16 %v847
    %v1056 = vunpack.c.h.b16 %v847
    %v1057 = vunpack.c.l.b16 %v848
    %v1058 = vunpack.c.h.b16 %v848
    %v1059 = vunpack.c.l.b16 %v849
    %v1060 = vunpack.c.h.b16 %v849
    %v1061 = vunpack.c.l.b16 %v850
    %v1062 = vunpack.c.h.b16 %v850
    %v1063 = vunpack.c.l.b16 %v851
    %v1064 = vunpack.c.h.b16 %v851
    %v1065 = vunpack.c.l.b16 %v852
    %v1066 = vunpack.c.h.b16 %v852
    %v1067 = vunpack.c.l.b16 %v853
    %v1068 = vunpack.c.h.b16 %v853
    %v1069 = vunpack.c.l.b16 %v854
    %v1070 = vunpack.c.h.b16 %v854
    %v1071 = vunpack.c.l.b16 %v855
    %v1072 = vunpack.c.h.b16 %v855
    %v1073 = vunpack.c.l.b16 %v856
    %v1074 = vunpack.c.h.b16 %v856
    %v1075 = vunpack.c.l.b16 %v857
    %v1076 = vunpack.c.h.b16 %v857
    %v1077 = vunpack.c.l.b16 %v858
    %v1078 = vunpack.c.h.b16 %v858
    %v1079 = vunpack.c.l.b16 %v859
    %v1080 = vunpack.c.h.b16 %v859
    %v1081 = vunpack.c.l.b16 %v860
    %v1082 = vunpack.c.h.b16 %v860
    %v1083 = vunpack.c.l.b16 %v861
    %v1084 = vunpack.c.h.b16 %v861
    %v1085 = vunpack.c.l.b16 %v862
    %v1086 = vunpack.c.h.b16 %v862
    %v1087 = vunpack.c.l.b16 %v863
    %v1088 = vunpack.c.h.b16 %v863
    %v1089 = vunpack.c.l.b16 %v864
    %v1090 = vunpack.c.h.b16 %v864
    %v1091 = vunpack.c.l.b16 %v865
    %v1092 = vunpack.c.h.b16 %v865
    %v1093 = vunpack.c.l.b16 %v866
    %v1094 = vunpack.c.h.b16 %v866
    %v1095 = vunpack.c.l.b16 %v867
    %v1096 = vunpack.c.h.b16 %v867
    %v1097 = vunpack.c.l.b16 %v868
    %v1098 = vunpack.c.h.b16 %v868
    %v1099 = vunpack.c.l.b16 %v869
    %v1100 = vunpack.c.h.b16 %v869
    %v1101 = vunpack.c.l.b16 %v870
    %v1102 = vunpack.c.h.b16 %v870
    %v1103 = vunpack.c.l.b16 %v871
    %v1104 = vunpack.c.h.b16 %v871
    %v1105 = vunpack.c.l.b16 %v872
    %v1106 = vunpack.c.h.b16 %v872
    %v1107 = vunpack.c.l.b16 %v873
    %v1108 = vunpack.c.h.b16 %v873
    %v1109 = vunpack.c.l.b16 %v874
    %v1110 = vunpack.c.h.b16 %v874
    %v1111 = vunpack.c.l.b16 %v875
    %v1112 = vunpack.c.h.b16 %v875
    %v1113 = vunpack.c.l.b16 %v876
    %v1114 = vunpack.c.h.b16 %v876
    %v1115 = vunpack.c.l.b16 %v877
    %v1116 = vunpack.c.h.b16 %v877
    %v1117 = vunpack.c.l.b16 %v878
    %v1118 = vunpack.c.h.b16 %v878
    %v1119 = vunpack.c.l.b16 %v879
    %v1120 = vunpack.c.h.b16 %v879
    %v1121 = vunpack.c.l.b16 %v880
    %v1122 = vunpack.c.h.b16 %v880
    %v1123 = vunpack.c.l.b16 %v881
    %v1124 = vunpack.c.h.b16 %v881
    %v1125 = vunpack.c.l.b16 %v882
    %v1126 = vunpack.c.h.b16 %v882
    %v1127 = vunpack.c.l.b16 %v883
    %v1128 = vunpack.c.h.b16 %v883
    %v1129 = vunpack.c.l.b16 %v884
    %v1130 = vunpack.c.h.b16 %v884
    %v1131 = vunpack.c.l.b16 %v885
    %v1132 = vunpack.c.h.b16 %v885
    %v1133 = vunpack.c.l.b16 %v886
    %v1134 = vunpack.c.h.b16 %v886
    %v1135 = vunpack.c.l.b16 %v887
    %v1136 = vunpack.c.h.b16 %v887
    %v1137 = vunpack.c.l.b16 %v888
    %v1138 = vunpack.c.h.b16 %v888
    %v1139 = vunpack.c.l.b16 %v889
    %v1140 = vunpack.c.h.b16 %v889
    %v1141 = vunpack.c.l.b16 %v890
    %v1142 = vunpack.c.h.b16 %v890
    %v1143 = vpack.c.b16 %v985, %v983
    %v1144 = vpack.c.b16 %v986, %v984
    %v1145 = vpack.c.b16 %v989, %v987
    %v1146 = vpack.c.b16 %v990, %v988
    %v1147 = vpack.c.b16 %v993, %v991
    %v1148 = vpack.c.b16 %v994, %v992
    %v1149 = vpack.c.b16 %v997, %v995
    %v1150 = vpack.c.b16 %v998, %v996
    %v1151 = vpack.c.b16 %v1001, %v999
    %v1152 = vpack.c.b16 %v1002, %v1000
    %v1153 = vpack.c.b16 %v1005, %v1003
    %v1154 = vpack.c.b16 %v1006, %v1004
    %v1155 = vpack.c.b16 %v1009, %v1007
    %v1156 = vpack.c.b16 %v1010, %v1008
    %v1157 = vpack.c.b16 %v1013, %v1011
    %v1158 = vpack.c.b16 %v1014, %v1012
    %v1159 = vpack.c.b16 %v1017, %v1015
    %v1160 = vpack.c.b16 %v1018, %v1016
    %v1161 = vpack.c.b16 %v1021, %v1019
    %v1162 = vpack.c.b16 %v1022, %v1020
    %v1163 = vpack.c.b16 %v1025, %v1023
    %v1164 = vpack.c.b16 %v1026, %v1024
    %v1165 = vpack.c.b16 %v1029, %v1027
    %v1166 = vpack.c.b16 %v1030, %v1028
    %v1167 = vpack.c.b16 %v1033, %v1031
    %v1168 = vpack.c.b16 %v1034, %v1032
    %v1169 = vpack.c.b16 %v1037, %v1035
    %v1170 = vpack.c.b16 %v1038, %v1036
    %v1171 = vpack.c.b16 %v1041, %v1039
    %v1172 = vpack.c.b16 %v1042, %v1040
    %v1173 = vpack.c.b16 %v1045, %v1043
    %v1174 = vpack.c.b16 %v1046, %v1044
    %v1175 = vpack.c.b16 %v1049, %v1047
    %v1176 = vpack.c.b16 %v1050, %v1048
    %v1177 = vpack.c.b16 %v1053, %v1051
    %v1178 = vpack.c.b16 %v1054, %v1052
    %v1179 = vpack.c.b16 %v1057, %v1055
    %v1180 = vpack.c.b16 %v1058, %v1056
    %v1181 = vpack.c.b16 %v1061, %v1059
    %v1182 = vpack.c.b16 %v1062, %v1060
    %v1183 = vpack.c.b16 %v1065, %v1063
    %v1184 = vpack.c.b16 %v1066, %v1064
    %v1185 = vpack.c.b16 %v1069, %v1067
    %v1186 = vpack.c.b16 %v1070, %v1068
    %v1187 = vpack.c.b16 %v1073, %v1071
    %v1188 = vpack.c.b16 %v1074, %v1072
    %v1189 = vpack.c.b16 %v1077, %v1075
    %v1190 = vpack.c.b16 %v1078, %v1076
    %v1191 = vpack.c.b16 %v1081, %v1079
    %v1192 = vpack.c.b16 %v1082, %v1080
    %v1193 = vpack.c.b16 %v1085, %v1083
    %v1194 = vpack.c.b16 %v1086, %v1084
    %v1195 = vpack.c.b16 %v1089, %v1087
    %v1196 = vpack.c.b16 %v1090, %v1088
    %v1197 = vpack.c.b16 %v1093, %v1091
    %v1198 = vpack.c.b16 %v1094, %v1092
    %v1199 = vpack.c.b16 %v1097, %v1095
    %v1200 = vpack.c.b16 %v1098, %v1096
    %v1201 = vpack.c.b16 %v1101, %v1099
    %v1202 = vpack.c.b16 %v1102, %v1100
    %v1203 = vpack.c.b16 %v1105, %v1103
    %v1204 = vpack.c.b16 %v1106, %v1104
    %v1205 = vpack.c.b16 %v1109, %v1107
    %v1206 = vpack.c.b16 %v1110, %v1108
    %v1207 = vpack.c.b16 %v1113, %v1111
    %v1208 = vpack.c.b16 %v1114, %v1112
    %v1209 = vpack.c.b16 %v1117, %v1115
    %v1210 = vpack.c.b16 %v1118, %v1116
    %v1211 = vpack.c.b16 %v1121, %v1119
    %v1212 = vpack.c.b16 %v1122, %v1120
    %v1213 = vpack.c.b16 %v1125, %v1123
    %v1214 = vpack.c.b16 %v1126, %v1124
    %v1215 = vpack.c.b16 %v1129, %v1127
    %v1216 = vpack.c.b16 %v1130, %v1128
    %v1217 = vpack.c.b16 %v1133, %v1131
    %v1218 = vpack.c.b16 %v1134, %v1132
    %v1219 = vpack.c.b16 %v1137, %v1135
    %v1220 = vpack.c.b16 %v1138, %v1136
    %v1221 = vpack.c.b16 %v1141, %v1139
    %v1222 = vpack.c.b16 %v1142, %v1140
    %1303 = vmatprep.subr.bf16.mxu0 %v1158
    %1304 = vmatpush1.bf16.msra.mxu0 %v1157
    %1305 = vmatprep.subr.bf16.mxu0 %v1156
    %1306 = vmatpush1.bf16.msra.mxu0 %v1155
    %1307 = vmatprep.subr.bf16.mxu0 %v1154
    %1308 = vmatpush1.bf16.msra.mxu0 %v1153
    %1309 = vmatprep.subr.bf16.mxu0 %v1152
    %1310 = vmatpush1.bf16.msra.mxu0 %v1151
    %1311 = vmatprep.subr.bf16.mxu0 %v1150
    %1312 = vmatpush1.bf16.msra.mxu0 %v1149
    %1313 = vmatprep.subr.bf16.mxu0 %v1148
    %1314 = vmatpush1.bf16.msra.mxu0 %v1147
    %1315 = vmatprep.subr.bf16.mxu0 %v1146
    %1316 = vmatpush1.bf16.msra.mxu0 %v1145
    %1317 = vmatprep.subr.bf16.mxu0 %v1144
    %1318 = vmatpush1.bf16.msra.mxu0 %v1143
    %1319 = vmatprep.subr.bf16.mxu0 %v1174
    %1320 = vmatpush2.bf16.msra.mxu0 %v1173
    %1321 = vmatprep.subr.bf16.mxu0 %v1172
    %1322 = vmatpush2.bf16.msra.mxu0 %v1171
    %1323 = vmatprep.subr.bf16.mxu0 %v1170
    %1324 = vmatpush2.bf16.msra.mxu0 %v1169
    %1325 = vmatprep.subr.bf16.mxu0 %v1168
    %1326 = vmatpush2.bf16.msra.mxu0 %v1167
    %1327 = vmatprep.subr.bf16.mxu0 %v1166
    %1328 = vmatpush2.bf16.msra.mxu0 %v1165
    %1329 = vmatprep.subr.bf16.mxu0 %v1164
    %1330 = vmatpush2.bf16.msra.mxu0 %v1163
    %1331 = vmatprep.subr.bf16.mxu0 %v1162
    %1332 = vmatpush2.bf16.msra.mxu0 %v1161
    %1333 = vmatprep.subr.bf16.mxu0 %v1160
    %1334 = vmatpush2.bf16.msra.mxu0 %v1159
    %1335 = vmatprep.mubr.bf16.mxu0 %v807
    %1336 = vmatmul.mubr.bf16.gmra.mxu0 %v806
    %v1337 = vpop.f32.mrf.mxu0
    %v1338 = vadd.f32 %v896, %v1337
    %v1339 = vpop.f32.mrf.mxu0
    %v1340 = vadd.f32 %v900, %v1339
    %v1341 = vpop.f32.mrf.mxu0
    %v1342 = vpop.f32.mrf.mxu0
    %1343 = vdwg.mxu0
    %1344 = vmatprep.subr.bf16.mxu0 %v1190
    %1345 = vmatpush1.bf16.msra.mxu0 %v1189
    %1346 = vmatprep.subr.bf16.mxu0 %v1188
    %1347 = vmatpush1.bf16.msra.mxu0 %v1187
    %1348 = vmatprep.subr.bf16.mxu0 %v1186
    %1349 = vmatpush1.bf16.msra.mxu0 %v1185
    %1350 = vmatprep.subr.bf16.mxu0 %v1184
    %1351 = vmatpush1.bf16.msra.mxu0 %v1183
    %1352 = vmatprep.subr.bf16.mxu0 %v1182
    %1353 = vmatpush1.bf16.msra.mxu0 %v1181
    %1354 = vmatprep.subr.bf16.mxu0 %v1180
    %1355 = vmatpush1.bf16.msra.mxu0 %v1179
    %1356 = vmatprep.subr.bf16.mxu0 %v1178
    %1357 = vmatpush1.bf16.msra.mxu0 %v1177
    %1358 = vmatprep.subr.bf16.mxu0 %v1176
    %1359 = vmatpush1.bf16.msra.mxu0 %v1175
    %1360 = vmatprep.subr.bf16.mxu0 %v1206
    %1361 = vmatpush2.bf16.msra.mxu0 %v1205
    %1362 = vmatprep.subr.bf16.mxu0 %v1204
    %1363 = vmatpush2.bf16.msra.mxu0 %v1203
    %1364 = vmatprep.subr.bf16.mxu0 %v1202
    %1365 = vmatpush2.bf16.msra.mxu0 %v1201
    %1366 = vmatprep.subr.bf16.mxu0 %v1200
    %1367 = vmatpush2.bf16.msra.mxu0 %v1199
    %1368 = vmatprep.subr.bf16.mxu0 %v1198
    %1369 = vmatpush2.bf16.msra.mxu0 %v1197
    %1370 = vmatprep.subr.bf16.mxu0 %v1196
    %1371 = vmatpush2.bf16.msra.mxu0 %v1195
    %1372 = vmatprep.subr.bf16.mxu0 %v1194
    %1373 = vmatpush2.bf16.msra.mxu0 %v1193
    %1374 = vmatprep.subr.bf16.mxu0 %v1192
    %1375 = vmatpush2.bf16.msra.mxu0 %v1191
    %1376 = vmatprep.mubr.bf16.mxu0 %v809
    %1377 = vmatmul.mubr.bf16.gmra.mxu0 %v808
    %v1378 = vpop.f32.mrf.mxu0
    %v1379 = vadd.f32 %v1338, %v1378
    %v1380 = vpop.f32.mrf.mxu0
    %v1381 = vadd.f32 %v1340, %v1380
    %v1382 = vpop.f32.mrf.mxu0
    %v1383 = vpop.f32.mrf.mxu0
    %1384 = vdwg.mxu0
    %1385 = vmatprep.subr.bf16.mxu0 %v1222
    %1386 = vmatpush1.bf16.msra.mxu0 %v1221
    %1387 = vmatprep.subr.bf16.mxu0 %v1220
    %1388 = vmatpush1.bf16.msra.mxu0 %v1219
    %1389 = vmatprep.subr.bf16.mxu0 %v1218
    %1390 = vmatpush1.bf16.msra.mxu0 %v1217
    %1391 = vmatprep.subr.bf16.mxu0 %v1216
    %1392 = vmatpush1.bf16.msra.mxu0 %v1215
    %1393 = vmatprep.subr.bf16.mxu0 %v1214
    %1394 = vmatpush1.bf16.msra.mxu0 %v1213
    %1395 = vmatprep.subr.bf16.mxu0 %v1212
    %1396 = vmatpush1.bf16.msra.mxu0 %v1211
    %1397 = vmatprep.subr.bf16.mxu0 %v1210
    %1398 = vmatpush1.bf16.msra.mxu0 %v1209
    %1399 = vmatprep.subr.bf16.mxu0 %v1208
    %1400 = vmatpush1.bf16.msra.mxu0 %v1207
    %1401 = vmatprep.subr.bf16.mxu0 0
    %1402 = vmatpush2.bf16.msra.mxu0 0
    %1403 = vmatprep.subr.bf16.mxu0 0
    %1404 = vmatpush2.bf16.msra.mxu0 0
    %1405 = vmatprep.subr.bf16.mxu0 0
    %1406 = vmatpush2.bf16.msra.mxu0 0
    %1407 = vmatprep.subr.bf16.mxu0 0
    %1408 = vmatpush2.bf16.msra.mxu0 0
    %1409 = vmatprep.subr.bf16.mxu0 0
    %1410 = vmatpush2.bf16.msra.mxu0 0
    %1411 = vmatprep.subr.bf16.mxu0 0
    %1412 = vmatpush2.bf16.msra.mxu0 0
    %1413 = vmatprep.subr.bf16.mxu0 0
    %1414 = vmatpush2.bf16.msra.mxu0 0
    %1415 = vmatprep.subr.bf16.mxu0 0
    %1416 = vmatpush2.bf16.msra.mxu0 0
    %1417 = vmatprep.mubr.bf16.mxu0 0
    %1418 = vmatmul.mubr.bf16.gmra.mxu0 %v810
    %v1419 = vpop.f32.mrf.mxu0
    %v1420 = vadd.f32 %v1379, %v1419
    %v1421 = vpop.f32.mrf.mxu0
    %v1422 = vadd.f32 %v1381, %v1421
    %v1423 = vpop.f32.mrf.mxu0
    %v1424 = vpop.f32.mrf.mxu0
    %1425 = vdwg.mxu0
    %v1426 = vld [vmem:[%s7] sm:$0x3]
    %v1427 = vld [vmem:[#allocation10] sm:$0x3]
    %v1428 = vadd.f32 %v1420, %v1422
    %1429 = vadd.xlane.f32.xlu0 %v1428
    %v1430 = vpop.xlane.xlu0 %1429
    %v1431 = vmul.f32 %v1430, 0.005
    %v1432 = vsub.f32 %v1420, %v1431
    %v1433 = vsub.f32 %v1422, %v1431
    %vm1434 = vcmp.lt.s32.totalorder %v695, 200
    %vm1435 = vcmp.lt.s32.totalorder %v696, 200
    %v1436 = vmul.f32 %v1432, %v1432
    %v1437 = vmul.f32 %v1433, %v1433
    %v1438 = vsel %vm1434, 1, 0
    %v1439 = vsel %vm1435, 1, 0
    %vm1440 = vcmp.eq.s32.totalorder %v1438, 1
    %vm1441 = vcmp.eq.s32.totalorder %v1439, 1
    %v1442 = vsel %vm1440, %v1436, 0.0
    %v1443 = vsel %vm1441, %v1437, 0.0
    %v1444 = vadd.f32 %v1442, %v1443
    %1445 = vadd.xlane.f32.xlu0 %v1444
    %v1446 = vpop.xlane.xlu0 %1445
    %v1447 = vmul.f32 %v1446, 0.005
    %v1448 = vadd.f32 %v1447, 1e-05
    %v1449 = vrsqrt.pop %v1448
    %v1450 = vmul.f32 %v1432, %v1449
    %v1451 = vmul.f32 %v1433, %v1449
    %v1453 = vlaneseq
    %v1454 = vshrl.u32 %v1453, 7
    %v1455 = vsub.s32 0, %v1454
    %v1456 = vrot.slane %v1426, %v1455
    %v1457 = vlaneseq
    %v1458 = vshrl.u32 %v1457, 7
    %v1459 = vsub.s32 1, %v1458
    %v1460 = vrot.slane %v1426, %v1459
    %v1463 = vmul.f32 %v1450, %v1456
    %v1464 = vmul.f32 %v1451, %v1460
    %v1466 = vlaneseq
    %v1467 = vshrl.u32 %v1466, 7
    %v1468 = vsub.s32 0, %v1467
    %v1469 = vrot.slane %v1427, %v1468
    %v1470 = vlaneseq
    %v1471 = vshrl.u32 %v1470, 7
    %v1472 = vsub.s32 1, %v1471
    %v1473 = vrot.slane %v1427, %v1472
    %v1476 = vadd.f32 %v1463, %v1469
    %v1477 = vadd.f32 %v1464, %v1473
    %v1478 = vpack.c.bf16 %v1476, %v1476
    %v1479 = vpack.c.bf16 %v1477, %v1477
    %v1480 = vmax.bf16 %v1478, 0
    %v1481 = vmax.bf16 %v1479, 0
    %v1482 = vld [vmem:[#allocation12] sm:$0xf]
    %v1483 = vld [vmem:[#allocation12 + $0x4] sm:$0xf]
    %v1484 = vld [vmem:[#allocation12 + $0x8] sm:$0xf]
    %v1485 = vld [vmem:[#allocation12 + $0xc] sm:$0xf]
    %v1486 = vld [vmem:[#allocation12 + $0x10] sm:$0xf]
    %v1487 = vld [vmem:[#allocation12 + $0x14] sm:$0xf]
    %v1488 = vld [vmem:[#allocation12 + $0x18] sm:$0xf]
    %v1489 = vld [vmem:[#allocation12 + $0x1c] sm:$0xf]
    %v1490 = vld [vmem:[#allocation12 + $0x20] sm:$0xf]
    %v1491 = vld [vmem:[#allocation12 + $0x24] sm:$0xf]
    %v1492 = vld [vmem:[#allocation12 + $0x28] sm:$0xf]
    %v1493 = vld [vmem:[#allocation12 + $0x2c] sm:$0xf]
    %v1494 = vld [vmem:[#allocation12 + $0x30] sm:$0xf]
    %v1495 = vld [vmem:[#allocation12 + $0x34] sm:$0xf]
    %v1496 = vld [vmem:[#allocation12 + $0x38] sm:$0xf]
    %v1497 = vld [vmem:[#allocation12 + $0x3c] sm:$0xf]
    %v1498 = vld [vmem:[#allocation12 + $0x40] sm:$0xf]
    %v1499 = vld [vmem:[#allocation12 + $0x44] sm:$0xf]
    %v1500 = vld [vmem:[#allocation12 + $0x48] sm:$0xf]
    %v1501 = vld [vmem:[#allocation12 + $0x4c] sm:$0xf]
    %v1502 = vld [vmem:[#allocation12 + $0x50] sm:$0xf]
    %v1503 = vld [vmem:[#allocation12 + $0x54] sm:$0xf]
    %v1504 = vld [vmem:[#allocation12 + $0x58] sm:$0xf]
    %v1505 = vld [vmem:[#allocation12 + $0x5c] sm:$0xf]
    %v1506 = vld [vmem:[#allocation12 + $0x60] sm:$0xf]
    %v1507 = vld [vmem:[#allocation12 + $0x64] sm:$0xf]
    %v1508 = vld [vmem:[#allocation12 + $0x68] sm:$0xf]
    %v1509 = vld [vmem:[#allocation12 + $0x6c] sm:$0xf]
    %v1510 = vld [vmem:[#allocation12 + $0x70] sm:$0xf]
    %v1511 = vld [vmem:[#allocation12 + $0x74] sm:$0xf]
    %v1512 = vld [vmem:[#allocation12 + $0x78] sm:$0xf]
    %v1513 = vld [vmem:[#allocation12 + $0x7c] sm:$0xf]
    %v1514 = vld [vmem:[#allocation13] sm:$0x1]
    %v1516 = vlaneseq
    %v1517 = vshrl.u32 %v1516, 7
    %v1518 = vsub.s32 0, %v1517
    %v1519 = vrot.slane %v1514, %v1518
    %v1553 = vunpack.c.l.b16 %v1482
    %v1554 = vunpack.c.l.b16 %v1483
    %v1555 = vunpack.c.l.b16 %v1484
    %v1556 = vunpack.c.l.b16 %v1485
    %v1557 = vunpack.c.l.b16 %v1486
    %v1558 = vunpack.c.l.b16 %v1487
    %v1559 = vunpack.c.l.b16 %v1488
    %v1560 = vunpack.c.l.b16 %v1489
    %v1561 = vunpack.c.l.b16 %v1490
    %v1562 = vunpack.c.l.b16 %v1491
    %v1563 = vunpack.c.l.b16 %v1492
    %v1564 = vunpack.c.l.b16 %v1493
    %v1565 = vunpack.c.l.b16 %v1494
    %v1566 = vunpack.c.l.b16 %v1495
    %v1567 = vunpack.c.l.b16 %v1496
    %v1568 = vunpack.c.l.b16 %v1497
    %v1569 = vunpack.c.l.b16 %v1498
    %v1570 = vunpack.c.l.b16 %v1499
    %v1571 = vunpack.c.l.b16 %v1500
    %v1572 = vunpack.c.l.b16 %v1501
    %v1573 = vunpack.c.l.b16 %v1502
    %v1574 = vunpack.c.l.b16 %v1503
    %v1575 = vunpack.c.l.b16 %v1504
    %v1576 = vunpack.c.l.b16 %v1505
    %v1577 = vunpack.c.l.b16 %v1506
    %v1578 = vunpack.c.l.b16 %v1507
    %v1579 = vunpack.c.l.b16 %v1508
    %v1580 = vunpack.c.l.b16 %v1509
    %v1581 = vunpack.c.l.b16 %v1510
    %v1582 = vunpack.c.l.b16 %v1511
    %v1583 = vunpack.c.l.b16 %v1512
    %v1584 = vunpack.c.l.b16 %v1513
    %v1585 = vpack.c.b16 %v1554, %v1553
    %v1586 = vpack.c.b16 %v1556, %v1555
    %v1587 = vpack.c.b16 %v1558, %v1557
    %v1588 = vpack.c.b16 %v1560, %v1559
    %v1589 = vpack.c.b16 %v1562, %v1561
    %v1590 = vpack.c.b16 %v1564, %v1563
    %v1591 = vpack.c.b16 %v1566, %v1565
    %v1592 = vpack.c.b16 %v1568, %v1567
    %v1593 = vpack.c.b16 %v1570, %v1569
    %v1594 = vpack.c.b16 %v1572, %v1571
    %v1595 = vpack.c.b16 %v1574, %v1573
    %v1596 = vpack.c.b16 %v1576, %v1575
    %v1597 = vpack.c.b16 %v1578, %v1577
    %v1598 = vpack.c.b16 %v1580, %v1579
    %v1599 = vpack.c.b16 %v1582, %v1581
    %v1600 = vpack.c.b16 %v1584, %v1583
    %1617 = vmatprep.subr.bf16.mxu0 0
    %1618 = vmatpush1.bf16.msra.mxu0 %v1592
    %1619 = vmatprep.subr.bf16.mxu0 0
    %1620 = vmatpush1.bf16.msra.mxu0 %v1591
    %1621 = vmatprep.subr.bf16.mxu0 0
    %1622 = vmatpush1.bf16.msra.mxu0 %v1590
    %1623 = vmatprep.subr.bf16.mxu0 0
    %1624 = vmatpush1.bf16.msra.mxu0 %v1589
    %1625 = vmatprep.subr.bf16.mxu0 0
    %1626 = vmatpush1.bf16.msra.mxu0 %v1588
    %1627 = vmatprep.subr.bf16.mxu0 0
    %1628 = vmatpush1.bf16.msra.mxu0 %v1587
    %1629 = vmatprep.subr.bf16.mxu0 0
    %1630 = vmatpush1.bf16.msra.mxu0 %v1586
    %1631 = vmatprep.subr.bf16.mxu0 0
    %1632 = vmatpush1.bf16.msra.mxu0 %v1585
    %1633 = vmatprep.subr.bf16.mxu0 0
    %1634 = vmatpush2.bf16.msra.mxu0 %v1600
    %1635 = vmatprep.subr.bf16.mxu0 0
    %1636 = vmatpush2.bf16.msra.mxu0 %v1599
    %1637 = vmatprep.subr.bf16.mxu0 0
    %1638 = vmatpush2.bf16.msra.mxu0 %v1598
    %1639 = vmatprep.subr.bf16.mxu0 0
    %1640 = vmatpush2.bf16.msra.mxu0 %v1597
    %1641 = vmatprep.subr.bf16.mxu0 0
    %1642 = vmatpush2.bf16.msra.mxu0 %v1596
    %1643 = vmatprep.subr.bf16.mxu0 0
    %1644 = vmatpush2.bf16.msra.mxu0 %v1595
    %1645 = vmatprep.subr.bf16.mxu0 0
    %1646 = vmatpush2.bf16.msra.mxu0 %v1594
    %1647 = vmatprep.subr.bf16.mxu0 0
    %1648 = vmatpush2.bf16.msra.mxu0 %v1593
    %1649 = vmatprep.mubr.bf16.mxu0 %v1481
    %1650 = vmatmul.mubr.bf16.gmra.mxu0 %v1480
    %v1651 = vpop.f32.mrf.mxu0
    %v1652 = vadd.f32 %v1519, %v1651
    %v1653 = vpop.f32.mrf.mxu0
    %v1654 = vpop.f32.mrf.mxu0
    %v1655 = vpop.f32.mrf.mxu0
    %1656 = vdwg.mxu0
    %v1657 = vld [vmem:[%s11] sm:$0x1]
    %v1658 = vld [vmem:[%s12] sm:$0x1]
    %1659 = vadd.xlane.f32.xlu0 %v1652
    %v1660 = vpop.xlane.xlu0 %1659
    %v1661 = vmul.f32 %v1660, 0.01
    %v1662 = vsub.f32 %v1652, %v1661
    %vm1663 = vcmp.lt.s32.totalorder %v695, 100
    %v1664 = vmul.f32 %v1662, %v1662
    %v1665 = vsel %vm1663, 1, 0
    %vm1666 = vcmp.eq.s32.totalorder %v1665, 1
    %v1667 = vsel %vm1666, %v1664, 0.0
    %1668 = vadd.xlane.f32.xlu0 %v1667
    %v1669 = vpop.xlane.xlu0 %1668
    %v1670 = vmul.f32 %v1669, 0.01
    %v1671 = vadd.f32 %v1670, 1e-05
    %v1672 = vrsqrt.pop %v1671
    %v1673 = vmul.f32 %v1662, %v1672
    %v1675 = vlaneseq
    %v1676 = vshrl.u32 %v1675, 7
    %v1677 = vsub.s32 0, %v1676
    %v1678 = vrot.slane %v1657, %v1677
    %v1680 = vmul.f32 %v1673, %v1678
    %v1682 = vlaneseq
    %v1683 = vshrl.u32 %v1682, 7
    %v1684 = vsub.s32 0, %v1683
    %v1685 = vrot.slane %v1658, %v1684
    %v1687 = vadd.f32 %v1680, %v1685
    %v1688 = vpack.c.bf16 %v1687, %v1687
    %v1689 = vmax.bf16 %v1688, 0
    %v1690 = vld [vmem:[#allocation15] sm:$0xf]
    %v1691 = vld [vmem:[#allocation15 + $0x4] sm:$0xf]
    %v1692 = vld [vmem:[#allocation15 + $0x8] sm:$0xf]
    %v1693 = vld [vmem:[#allocation15 + $0xc] sm:$0xf]
    %v1694 = vld [vmem:[#allocation15 + $0x10] sm:$0xf]
    %v1695 = vld [vmem:[#allocation15 + $0x14] sm:$0xf]
    %v1696 = vld [vmem:[#allocation15 + $0x18] sm:$0xf]
    %v1697 = vld [vmem:[#allocation15 + $0x1c] sm:$0xf]
    %v1698 = vld [vmem:[#allocation15 + $0x20] sm:$0xf]
    %v1699 = vld [vmem:[#allocation15 + $0x24] sm:$0xf]
    %v1700 = vld [vmem:[#allocation15 + $0x28] sm:$0xf]
    %v1701 = vld [vmem:[#allocation15 + $0x2c] sm:$0xf]
    %v1702 = vld [vmem:[#allocation15 + $0x30] sm:$0xf]
    %v1703 = vld [vmem:[#allocation15 + $0x34] sm:$0xf]
    %v1704 = vld [vmem:[#allocation15 + $0x38] sm:$0xf]
    %v1705 = vld [vmem:[#allocation15 + $0x3c] sm:$0xf]
    %v1706 = vld [vmem:[#allocation16] sm:$0x1]
    %v1708 = vlaneseq
    %v1709 = vshrl.u32 %v1708, 7
    %v1710 = vsub.s32 0, %v1709
    %v1711 = vrot.slane %v1706, %v1710
    %v1729 = vunpack.c.l.b16 %v1690
    %v1730 = vunpack.c.l.b16 %v1691
    %v1731 = vunpack.c.l.b16 %v1692
    %v1732 = vunpack.c.l.b16 %v1693
    %v1733 = vunpack.c.l.b16 %v1694
    %v1734 = vunpack.c.l.b16 %v1695
    %v1735 = vunpack.c.l.b16 %v1696
    %v1736 = vunpack.c.l.b16 %v1697
    %v1737 = vunpack.c.l.b16 %v1698
    %v1738 = vunpack.c.l.b16 %v1699
    %v1739 = vunpack.c.l.b16 %v1700
    %v1740 = vunpack.c.l.b16 %v1701
    %v1741 = vunpack.c.l.b16 %v1702
    %v1742 = vunpack.c.l.b16 %v1703
    %v1743 = vunpack.c.l.b16 %v1704
    %v1744 = vunpack.c.l.b16 %v1705
    %v1745 = vpack.c.b16 %v1730, %v1729
    %v1746 = vpack.c.b16 %v1732, %v1731
    %v1747 = vpack.c.b16 %v1734, %v1733
    %v1748 = vpack.c.b16 %v1736, %v1735
    %v1749 = vpack.c.b16 %v1738, %v1737
    %v1750 = vpack.c.b16 %v1740, %v1739
    %v1751 = vpack.c.b16 %v1742, %v1741
    %v1752 = vpack.c.b16 %v1744, %v1743
    %1761 = vmatprep.subr.bf16.mxu0 0
    %1762 = vmatpush1.bf16.msra.mxu0 %v1752
    %1763 = vmatprep.subr.bf16.mxu0 0
    %1764 = vmatpush1.bf16.msra.mxu0 %v1751
    %1765 = vmatprep.subr.bf16.mxu0 0
    %1766 = vmatpush1.bf16.msra.mxu0 %v1750
    %1767 = vmatprep.subr.bf16.mxu0 0
    %1768 = vmatpush1.bf16.msra.mxu0 %v1749
    %1769 = vmatprep.subr.bf16.mxu0 0
    %1770 = vmatpush1.bf16.msra.mxu0 %v1748
    %1771 = vmatprep.subr.bf16.mxu0 0
    %1772 = vmatpush1.bf16.msra.mxu0 %v1747
    %1773 = vmatprep.subr.bf16.mxu0 0
    %1774 = vmatpush1.bf16.msra.mxu0 %v1746
    %1775 = vmatprep.subr.bf16.mxu0 0
    %1776 = vmatpush1.bf16.msra.mxu0 %v1745
    %1777 = vmatprep.subr.bf16.mxu0 0
    %1778 = vmatpush2.bf16.msra.mxu0 0
    %1779 = vmatprep.subr.bf16.mxu0 0
    %1780 = vmatpush2.bf16.msra.mxu0 0
    %1781 = vmatprep.subr.bf16.mxu0 0
    %1782 = vmatpush2.bf16.msra.mxu0 0
    %1783 = vmatprep.subr.bf16.mxu0 0
    %1784 = vmatpush2.bf16.msra.mxu0 0
    %1785 = vmatprep.subr.bf16.mxu0 0
    %1786 = vmatpush2.bf16.msra.mxu0 0
    %1787 = vmatprep.subr.bf16.mxu0 0
    %1788 = vmatpush2.bf16.msra.mxu0 0
    %1789 = vmatprep.subr.bf16.mxu0 0
    %1790 = vmatpush2.bf16.msra.mxu0 0
    %1791 = vmatprep.subr.bf16.mxu0 0
    %1792 = vmatpush2.bf16.msra.mxu0 0
    %1793 = vmatprep.mubr.bf16.mxu0 0
    %1794 = vmatmul.mubr.bf16.gmra.mxu0 %v1689
    %v1795 = vpop.f32.mrf.mxu0
    %v1796 = vadd.f32 %v1711, %v1795
    %v1797 = vpop.f32.mrf.mxu0
    %v1798 = vpop.f32.mrf.mxu0
    %v1799 = vpop.f32.mrf.mxu0
    %1800 = vdwg.mxu0
    %v1801 = vxor.u32 %v1796, 2147483648
    %v1802 = vmul.f32 %v1801, 1.442695
    %v1803 = vpow.pop %v1802
    %v1804 = vadd.f32 %v1803, 1.0
    %v1805 = vrcp.pop %v1804
    %v1806 = vmul.f32 1.0, %v1805
    %v1807 = vpack.c.bf16 %v1806, %v1806
    %v1810 = vunpack.c.l.s4 1966171168
    %v1811 = vunpack.c.0.s8 %v1810
    %v1812 = vlaneseq
    %v1813 = vshrl.u32 %v1812, 7
    %v1814 = vsub.s32 %v1811, %v1813
    %v1815 = vrot.slane %v1807, %v1814
    %v1816 = vcombine.high %v1815, %v1815
    %v1818 = vunpack.c.l.s4 1966171168
    %v1819 = vunpack.c.0.s8 %v1818
    %v1820 = vlaneseq
    %v1821 = vshrl.u32 %v1820, 7
    %v1822 = vsub.s32 %v1819, %v1821
    %v1823 = vrot.slane %v1815, %v1822
    %v1825 = vunpack.c.l.s4 1966171168
    %v1826 = vunpack.c.0.s8 %v1825
    %v1827 = vlaneseq
    %v1828 = vshrl.u32 %v1827, 7
    %v1829 = vsub.s32 %v1826, %v1828
    %v1830 = vrot.slane %v1816, %v1829
    %v1831 = vcombine.high %v1823, %v1823
    %v1832 = vcombine.high %v1830, %v1830
    %1837 = vst [vmem:[#allocation18] sm:$0x1] %v1823
    %1838 = vst [vmem:[#allocation18 + $0x1] sm:$0x1] %v1830
    %1839 = vst [vmem:[#allocation18 + $0x2] sm:$0x1] %v1831
    %1840 = vst [vmem:[#allocation18 + $0x3] sm:$0x1] %v1832
    // Predicated region
    $region102: #{generator_forward.1} parent=1 // pred_check
      _
    $region103: #{generator_forward.1} parent=1 // pred_check_branch
      %1842 = sbr.rel (0) target = $region105
    $region104: #{generator_forward.1} parent=1 // pred_region
      // Predicated region
      $region106: #{generator_forward.1} parent=104 // pred_check
        _
      $region107: #{generator_forward.1} parent=104 // pred_check_branch
        %1844 = sbr.rel (0) target = $region109
      $region108: #{generator_forward.1} parent=104 // pred_region
        // Predicated region
        $region110: #{generator_forward.1} parent=108 // pred_check
          _
        $region111: #{generator_forward.1} parent=108 // pred_check_branch
          %1846 = sbr.rel target = $region113
        $region112: #{generator_forward.1} parent=108 // pred_region
          // Predicated region
          $region125: #{generator_forward.1} parent=112 // pred_check
            _
          $region126: #{generator_forward.1} parent=112 // pred_check_branch
            %1862 = sbr.rel (0) target = $region128
          $region127: #{generator_forward.1} parent=112 // pred_region
            %s1864 = ssub.s32 2, 1
            loop: start=0, step=1, limit=1
            $region129: #{generator_forward.1} parent=127 // loop_pre_header
              _
            $region130: #{generator_forward.1} parent=127 // loop_header
              %s1866 = sphi 0, %s1870
              %p1867 = scmp.ge.s32.totalorder %s1866, 1
              %s1871 = sphi [#allocation18], [#allocation18]
              %s1872 = sphi %s15, %s15
            $region131: #{generator_forward.1} parent=127 // loop_header_branch
              %1869 = sbr.rel (%p1867) target = $region135
            $region132: #{generator_forward.1} parent=127 // loop_body
              %v1873 = vld [vmem:[%s1871] sm:%s1864]
              %1874 = vst [vmem:[%s1872] sm:%s1864] %v1873
            $region133: #{generator_forward.1} parent=127 // loop_footer
              %s1870 = sadd.s32 1, %s1866
            $region134: #{generator_forward.1} parent=127 // loop_footer_branch
              %1865 = sbr.rel target = $region130
            $region135: #{generator_forward.1} parent=127 // loop_exit
              _
          $region128: #{generator_forward.1} parent=112 // pred_fallthru
            _
        $region113: #{generator_forward.1} parent=108 // pred_fallthru
          _
        // Predicated region
        $region114: #{generator_forward.1} parent=108 // pred_check
          _
        $region115: #{generator_forward.1} parent=108 // pred_check_branch
          %1848 = sbr.rel (0) target = $region117
        $region116: #{generator_forward.1} parent=108 // pred_region
          %s1850 = ssub.s32 2, 1
          loop: start=0, step=1, limit=1
          $region118: #{generator_forward.1} parent=116 // loop_pre_header
            _
          $region119: #{generator_forward.1} parent=116 // loop_header
            %s1852 = sphi 0, %s1856
            %p1853 = scmp.ge.s32.totalorder %s1852, 1
            %s1857 = sphi [#allocation18], [#allocation18]
            %s1858 = sphi %s15, %s15
          $region120: #{generator_forward.1} parent=116 // loop_header_branch
            %1855 = sbr.rel (%p1853) target = $region124
          $region121: #{generator_forward.1} parent=116 // loop_body
            %v1859 = vld [vmem:[%s1857] sm:%s1850]
            %1860 = vst [vmem:[%s1858] sm:%s1850] %v1859
          $region122: #{generator_forward.1} parent=116 // loop_footer
            %s1856 = sadd.s32 1, %s1852
          $region123: #{generator_forward.1} parent=116 // loop_footer_branch
            %1851 = sbr.rel target = $region119
          $region124: #{generator_forward.1} parent=116 // loop_exit
            _
        $region117: #{generator_forward.1} parent=108 // pred_fallthru
          _
      $region109: #{generator_forward.1} parent=104 // pred_fallthru
        _
      %1875 = vnop
    $region105: #{generator_forward.1} parent=1 // pred_fallthru
      _
    // Predicated region
    $region136: #{generator_forward.1} parent=1 // pred_check
      _
    $region137: #{generator_forward.1} parent=1 // pred_check_branch
      %1877 = sbr.rel (0) target = $region139
    $region138: #{generator_forward.1} parent=1 // pred_region
      _
    $region139: #{generator_forward.1} parent=1 // pred_fallthru
      _
    %1878 = vsyncpa [#allocation3], 1
    %1879 = vsyncpa [#allocation5], 1
    %1880 = vsyncpa [#allocation8], 1
    %1881 = vsyncpa [#allocation11], 1
    %1882 = vsyncpa [#allocation14], 1
    %1883 = vsyncpa [#allocation17], 1

</llo_original>
